<compile_context>
chip_gen: v7x
topology: tpu7x:2x2x1
jax: 0.10.0
libtpu: 0.0.40
codegen_flags: <defaults>
</compile_context>

<pallas_src>
import jax
import jax.numpy as jnp
from jax.experimental import pallas as pl
from jax.experimental.pallas import tpu as pltpu


def _make_relu_conv1x1_kernel(mxu_dtype):
    def kernel(x_ref, w_ref, o_ref):
        # x_ref: [C_in, hw_blk]   (slice of one image's NCHW-native [C_in, H*W] view)
        # w_ref: [C_out, C_in]    (resident: constant block index, single-buffered)
        # o_ref: [C_out, hw_blk]
        x = jnp.maximum(x_ref[...], jnp.zeros((), x_ref.dtype))  # ReLU in f32 (v5e VPU has no bf16)
        w = w_ref[...]
        if mxu_dtype is not None:
            x = x.astype(mxu_dtype)
            w = w.astype(mxu_dtype)
        o_ref[...] = jnp.dot(                                    # 1x1 conv on the MXU, f32 accumulate
            w, x, preferred_element_type=jnp.float32
        ).astype(o_ref.dtype)

    return kernel


def relu_conv1x1(x_nchw: jax.Array, weight_oihw: jax.Array, *,
                 hw_tile: int = 512, mxu_dtype=None) -> jax.Array:
    """ReLU followed by bias-free 1x1 conv, matching PyTorch Conv2d semantics.

    x_nchw:      [N, C_in, H, W]
    weight_oihw: [C_out, C_in, 1, 1]  (PyTorch Conv2d weight layout)
    returns:     [N, C_out, H, W]

    hw_tile must be a multiple of 128 (only used when H*W > hw_tile; otherwise
    the full H*W extent is taken as the pixel block, which satisfies the
    (8,128) BlockSpec rule via the full-dim exception).
    """
    N, C_in, H, W = x_nchw.shape
    C_out, C_in_w, kh, kw = weight_oihw.shape
    assert (kh, kw) == (1, 1), "kernel only implements 1x1 convs"
    assert C_in_w == C_in
    assert hw_tile % 128 == 0, "hw_tile must be a multiple of 128"

    HW = H * W
    # Free reshapes of the native layouts -- no XLA transposes.
    x_mat = x_nchw.reshape(N, C_in, HW)            # [N, C_in, HW]
    w_mat = weight_oihw.reshape(C_out, C_in)       # [C_out, C_in]

    # Full-extent pixel block when it fits (one contiguous DMA, no masked tail);
    # otherwise lane-dense 128-multiple tiles.
    hw_blk = HW if HW <= hw_tile else hw_tile
    n_hw = pl.cdiv(HW, hw_blk)

    itemsize = x_nchw.dtype.itemsize
    cost = pl.CostEstimate(
        flops=2 * N * C_out * C_in * HW,
        transcendentals=0,
        bytes_accessed=(N * C_in * HW * itemsize            # x
                        + C_out * C_in * itemsize           # weight
                        + N * C_out * HW * itemsize),       # out
    )

    out_mat = pl.pallas_call(
        _make_relu_conv1x1_kernel(mxu_dtype),
        out_shape=jax.ShapeDtypeStruct((N, C_out, HW), x_nchw.dtype),
        grid=(N, n_hw),
        in_specs=[
            # N dim squeezed out; one [C_in, hw_blk] slab per grid step.
            pl.BlockSpec((None, C_in, hw_blk), lambda n, j: (n, 0, j)),
            # Weight: constant block index -> DMA'd once, stays resident.
            # Single buffer: no point double-buffering a never-changing block.
            pl.BlockSpec((C_out, C_in), lambda n, j: (0, 0),
                         pipeline_mode=pl.Buffered(1)),
        ],
        out_specs=pl.BlockSpec((None, C_out, hw_blk), lambda n, j: (n, 0, j)),
        compiler_params=pltpu.CompilerParams(
            dimension_semantics=("parallel", "parallel"),
        ),
        cost_estimate=cost,
    )(x_mat, w_mat)

    # Free reshape back to NCHW.
    return out_mat.reshape(N, C_out, H, W)


if __name__ == "__main__":
    key = jax.random.PRNGKey(0)
    k_x, k_w = jax.random.split(key)

    # Shapes implied by the module: channels fixed (1008 -> 192), spatial 14x14.
    N, C_in, H, W = 1, 1008, 14, 14
    C_out = 192

    x = jax.random.normal(k_x, (N, C_in, H, W), dtype=jnp.float32)
    # Deterministic synthetic weights (same shape as PyTorch Conv2d weight).
    w = jax.random.normal(k_w, (C_out, C_in, 1, 1), dtype=jnp.float32) * 0.02

    out = jax.block_until_ready(relu_conv1x1(x, w))

    # Reference check in plain JAX (same math, full-precision contraction).
    x_relu = jnp.maximum(x, 0.0)
    ref = jnp.einsum(
        "nchw,oc->nohw", x_relu, w.reshape(C_out, C_in),
        precision=jax.lax.Precision.HIGHEST,
    )
    assert out.shape == (N, C_out, H, W), out.shape
    assert jnp.allclose(out, ref, atol=1e-3, rtol=1e-3), float(
        jnp.max(jnp.abs(out - ref))
    )

    print("KERNEL_OK")
</pallas_src>

<mosaic_0001>
module attributes {stable_mosaic.version = 11 : i64} {
  func.func @kernel(%arg0: i32, %arg1: i32, %arg2: memref<1x1008x196xf32, #tpu.memory_space<vmem>>, %arg3: memref<192x1008xf32, #tpu.memory_space<vmem>>, %arg4: memref<1x192x196xf32, #tpu.memory_space<vmem>>) attributes {dimension_semantics = [#tpu.dimension_semantics<parallel>, #tpu.dimension_semantics<parallel>], iteration_bounds = array<i64: 1, 1>, scalar_prefetch = 0 : i64, scratch_operands = 0 : i64, tpu.core_type = #tpu.core_type<tc>, window_params = [{transform_indices = @transform_0, window_bounds = array<i64: 1, 1008, 196>}, {pipeline_mode = #tpu.pipeline_mode<synchronous>, transform_indices = @transform_1, window_bounds = array<i64: 192, 1008>}, {transform_indices = @transform_2, window_bounds = array<i64: 1, 192, 196>}]} {
    %c0 = arith.constant 0 : index
    %c0_0 = arith.constant 0 : index
    %c0_1 = arith.constant 0 : index
    %0 = vector.load %arg2[%c0, %c0_0, %c0_1] : memref<1x1008x196xf32, #tpu.memory_space<vmem>>, vector<1x1008x196xf32>
    %1 = vector.shape_cast %0 : vector<1x1008x196xf32> to vector<1008x196xf32>
    %cst = arith.constant 0.000000e+00 : f32
    %2 = vector.broadcast %cst : f32 to vector<1008x196xf32>
    %3 = arith.maximumf %1, %2 : vector<1008x196xf32>
    %c0_2 = arith.constant 0 : index
    %c0_3 = arith.constant 0 : index
    %4 = vector.load %arg3[%c0_2, %c0_3] : memref<192x1008xf32, #tpu.memory_space<vmem>>, vector<192x1008xf32>
    %cst_4 = arith.constant dense<0.000000e+00> : vector<192x196xf32>
    %5 = tpu.matmul %4, %3, %cst_4 {dimension_numbers = #tpu.dot_dimension_numbers<[1], [0], [0], [1], [0, 0, 1, 1], [], []>} : vector<192x1008xf32>, vector<1008x196xf32>, vector<192x196xf32> -> vector<192x196xf32>
    %c0_5 = arith.constant 0 : index
    %c0_6 = arith.constant 0 : index
    %c0_7 = arith.constant 0 : index
    %6 = vector.load %arg4[%c0_5, %c0_6, %c0_7] : memref<1x192x196xf32, #tpu.memory_space<vmem>>, vector<1x192x196xf32>
    %7 = vector.shape_cast %6 : vector<1x192x196xf32> to vector<192x196xf32>
    %8 = vector.shape_cast %5 : vector<192x196xf32> to vector<1x192x196xf32>
    tpu.vector_store %arg4[%c0_5, %c0_6, %c0_7], %8 {strides = array<i32>} : memref<1x192x196xf32, #tpu.memory_space<vmem>>, vector<1x192x196xf32>,
    return
  }
  func.func @transform_0(%arg0: i32, %arg1: i32) -> (i32, i32, i32) {
    %c0_i32 = arith.constant 0 : i32
    %c0_i32_0 = arith.constant 0 : i32
    return %arg0, %c0_i32, %arg1 : i32, i32, i32
  }
  func.func @transform_1(%arg0: i32, %arg1: i32) -> (i32, i32) {
    %c0_i32 = arith.constant 0 : i32
    %c0_i32_0 = arith.constant 0 : i32
    %c0_i32_1 = arith.constant 0 : i32
    return %c0_i32, %c0_i32_0 : i32, i32
  }
  func.func @transform_2(%arg0: i32, %arg1: i32) -> (i32, i32, i32) {
    %c0_i32 = arith.constant 0 : i32
    %c0_i32_0 = arith.constant 0 : i32
    return %arg0, %c0_i32, %arg1 : i32, i32, i32
  }
}

</mosaic_0001>

<llo_original>
// kernel: tpu_custom_call.1
$region0: #{tpu_custom_call.1}
  #allocation0 [shape = 'u32[]', space=smem, size = 0x4, offset = 0x4, fixed_abs, tag = 'smem constant byte address 0x4 - core index']
  #allocation1 [shape = 'u32[144,128]{1,0:T(1,128)}', space=vmem, size = 0x12000, scoped, tag = 'internal scratch']
  %s0 = inlined_call_operand.vmem [shape: f32[1,1008,196], index: 0, kind: input, shape index: {}]
  %s1 = inlined_call_operand.vmem [shape: f32[192,1008], index: 1, kind: input, shape index: {}]
  %s2 = inlined_call_operand.hbm [shape: f32[1,192,196], index: 2, kind: output, shape index: {}]
  %s3 = sld [smem:[#allocation0]]
  $region18: #{tpu_custom_call.1} parent=0
    _
  %s5 = ssub.s32 1, %s3
  %s6 = scalar_select 0, %s5, %s3
  $region1: #{tpu_custom_call.1} parent=0
    #allocation2 [shape = 'u8[196608]{0}', space=vmem, size = 0x30000, scoped, tag = 'output window, operand 0, single buffered']
    #allocation3 [shape = 's32[1]{0}', space=sflag, size = 0x4, scoped, tag = 'scoped memory for tpu_custom_call.1']
    %7 = vsyncpa [#allocation3], 0
    // Predicated region
    $region2: #{tpu_custom_call.1} parent=1 // pred_check
      _
    $region3: #{tpu_custom_call.1} parent=1 // pred_check_branch
      %9 = sbr.rel (0) target = $region5
    $region4: #{tpu_custom_call.1} parent=1 // pred_region
      _
    $region5: #{tpu_custom_call.1} parent=1 // pred_fallthru
      _
    // Predicated region
    $region6: #{tpu_custom_call.1} parent=1 // pred_check
      _
    $region7: #{tpu_custom_call.1} parent=1 // pred_check_branch
      %11 = sbr.rel (0) target = $region9
    $region8: #{tpu_custom_call.1} parent=1 // pred_region
      _
    $region9: #{tpu_custom_call.1} parent=1 // pred_fallthru
      _
    %v12 = vld [vmem:[%s0] sm:$0xff]
    %v13 = vld [vmem:[%s0 + $0x8] sm:$0xff]
    %v14 = vld [vmem:[%s0 + $0x10] sm:$0xff]
    %v15 = vld [vmem:[%s0 + $0x18] sm:$0xff]
    %v16 = vld [vmem:[%s0 + $0x20] sm:$0xff]
    %v17 = vld [vmem:[%s0 + $0x28] sm:$0xff]
    %v18 = vld [vmem:[%s0 + $0x30] sm:$0xff]
    %v19 = vld [vmem:[%s0 + $0x38] sm:$0xff]
    %v20 = vld [vmem:[%s0 + $0x40] sm:$0xff]
    %v21 = vld [vmem:[%s0 + $0x48] sm:$0xff]
    %v22 = vld [vmem:[%s0 + $0x50] sm:$0xff]
    %v23 = vld [vmem:[%s0 + $0x58] sm:$0xff]
    %v24 = vld [vmem:[%s0 + $0x60] sm:$0xff]
    %v25 = vld [vmem:[%s0 + $0x68] sm:$0xff]
    %v26 = vld [vmem:[%s0 + $0x70] sm:$0xff]
    %v27 = vld [vmem:[%s0 + $0x78] sm:$0xff]
    %v28 = vld [vmem:[%s0 + $0x80] sm:$0xff]
    %v29 = vld [vmem:[%s0 + $0x88] sm:$0xff]
    %v30 = vld [vmem:[%s0 + $0x90] sm:$0xff]
    %v31 = vld [vmem:[%s0 + $0x98] sm:$0xff]
    %v32 = vld [vmem:[%s0 + $0xa0] sm:$0xff]
    %v33 = vld [vmem:[%s0 + $0xa8] sm:$0xff]
    %v34 = vld [vmem:[%s0 + $0xb0] sm:$0xff]
    %v35 = vld [vmem:[%s0 + $0xb8] sm:$0xff]
    %v36 = vld [vmem:[%s0 + $0xc0] sm:$0xff]
    %v37 = vld [vmem:[%s0 + $0xc8] sm:$0xff]
    %v38 = vld [vmem:[%s0 + $0xd0] sm:$0xff]
    %v39 = vld [vmem:[%s0 + $0xd8] sm:$0xff]
    %v40 = vld [vmem:[%s0 + $0xe0] sm:$0xff]
    %v41 = vld [vmem:[%s0 + $0xe8] sm:$0xff]
    %v42 = vld [vmem:[%s0 + $0xf0] sm:$0xff]
    %v43 = vld [vmem:[%s0 + $0xf8] sm:$0xff]
    %v44 = vld [vmem:[%s0 + $0x100] sm:$0xff]
    %v45 = vld [vmem:[%s0 + $0x108] sm:$0xff]
    %v46 = vld [vmem:[%s0 + $0x110] sm:$0xff]
    %v47 = vld [vmem:[%s0 + $0x118] sm:$0xff]
    %v48 = vld [vmem:[%s0 + $0x120] sm:$0xff]
    %v49 = vld [vmem:[%s0 + $0x128] sm:$0xff]
    %v50 = vld [vmem:[%s0 + $0x130] sm:$0xff]
    %v51 = vld [vmem:[%s0 + $0x138] sm:$0xff]
    %v52 = vld [vmem:[%s0 + $0x140] sm:$0xff]
    %v53 = vld [vmem:[%s0 + $0x148] sm:$0xff]
    %v54 = vld [vmem:[%s0 + $0x150] sm:$0xff]
    %v55 = vld [vmem:[%s0 + $0x158] sm:$0xff]
    %v56 = vld [vmem:[%s0 + $0x160] sm:$0xff]
    %v57 = vld [vmem:[%s0 + $0x168] sm:$0xff]
    %v58 = vld [vmem:[%s0 + $0x170] sm:$0xff]
    %v59 = vld [vmem:[%s0 + $0x178] sm:$0xff]
    %v60 = vld [vmem:[%s0 + $0x180] sm:$0xff]
    %v61 = vld [vmem:[%s0 + $0x188] sm:$0xff]
    %v62 = vld [vmem:[%s0 + $0x190] sm:$0xff]
    %v63 = vld [vmem:[%s0 + $0x198] sm:$0xff]
    %v64 = vld [vmem:[%s0 + $0x1a0] sm:$0xff]
    %v65 = vld [vmem:[%s0 + $0x1a8] sm:$0xff]
    %v66 = vld [vmem:[%s0 + $0x1b0] sm:$0xff]
    %v67 = vld [vmem:[%s0 + $0x1b8] sm:$0xff]
    %v68 = vld [vmem:[%s0 + $0x1c0] sm:$0xff]
    %v69 = vld [vmem:[%s0 + $0x1c8] sm:$0xff]
    %v70 = vld [vmem:[%s0 + $0x1d0] sm:$0xff]
    %v71 = vld [vmem:[%s0 + $0x1d8] sm:$0xff]
    %v72 = vld [vmem:[%s0 + $0x1e0] sm:$0xff]
    %v73 = vld [vmem:[%s0 + $0x1e8] sm:$0xff]
    %v74 = vld [vmem:[%s0 + $0x1f0] sm:$0xff]
    %v75 = vld [vmem:[%s0 + $0x1f8] sm:$0xff]
    %v76 = vld [vmem:[%s0 + $0x200] sm:$0xff]
    %v77 = vld [vmem:[%s0 + $0x208] sm:$0xff]
    %v78 = vld [vmem:[%s0 + $0x210] sm:$0xff]
    %v79 = vld [vmem:[%s0 + $0x218] sm:$0xff]
    %v80 = vld [vmem:[%s0 + $0x220] sm:$0xff]
    %v81 = vld [vmem:[%s0 + $0x228] sm:$0xff]
    %v82 = vld [vmem:[%s0 + $0x230] sm:$0xff]
    %v83 = vld [vmem:[%s0 + $0x238] sm:$0xff]
    %v84 = vld [vmem:[%s0 + $0x240] sm:$0xff]
    %v85 = vld [vmem:[%s0 + $0x248] sm:$0xff]
    %v86 = vld [vmem:[%s0 + $0x250] sm:$0xff]
    %v87 = vld [vmem:[%s0 + $0x258] sm:$0xff]
    %v88 = vld [vmem:[%s0 + $0x260] sm:$0xff]
    %v89 = vld [vmem:[%s0 + $0x268] sm:$0xff]
    %v90 = vld [vmem:[%s0 + $0x270] sm:$0xff]
    %v91 = vld [vmem:[%s0 + $0x278] sm:$0xff]
    %v92 = vld [vmem:[%s0 + $0x280] sm:$0xff]
    %v93 = vld [vmem:[%s0 + $0x288] sm:$0xff]
    %v94 = vld [vmem:[%s0 + $0x290] sm:$0xff]
    %v95 = vld [vmem:[%s0 + $0x298] sm:$0xff]
    %v96 = vld [vmem:[%s0 + $0x2a0] sm:$0xff]
    %v97 = vld [vmem:[%s0 + $0x2a8] sm:$0xff]
    %v98 = vld [vmem:[%s0 + $0x2b0] sm:$0xff]
    %v99 = vld [vmem:[%s0 + $0x2b8] sm:$0xff]
    %v100 = vld [vmem:[%s0 + $0x2c0] sm:$0xff]
    %v101 = vld [vmem:[%s0 + $0x2c8] sm:$0xff]
    %v102 = vld [vmem:[%s0 + $0x2d0] sm:$0xff]
    %v103 = vld [vmem:[%s0 + $0x2d8] sm:$0xff]
    %v104 = vld [vmem:[%s0 + $0x2e0] sm:$0xff]
    %v105 = vld [vmem:[%s0 + $0x2e8] sm:$0xff]
    %v106 = vld [vmem:[%s0 + $0x2f0] sm:$0xff]
    %v107 = vld [vmem:[%s0 + $0x2f8] sm:$0xff]
    %v108 = vld [vmem:[%s0 + $0x300] sm:$0xff]
    %v109 = vld [vmem:[%s0 + $0x308] sm:$0xff]
    %v110 = vld [vmem:[%s0 + $0x310] sm:$0xff]
    %v111 = vld [vmem:[%s0 + $0x318] sm:$0xff]
    %v112 = vld [vmem:[%s0 + $0x320] sm:$0xff]
    %v113 = vld [vmem:[%s0 + $0x328] sm:$0xff]
    %v114 = vld [vmem:[%s0 + $0x330] sm:$0xff]
    %v115 = vld [vmem:[%s0 + $0x338] sm:$0xff]
    %v116 = vld [vmem:[%s0 + $0x340] sm:$0xff]
    %v117 = vld [vmem:[%s0 + $0x348] sm:$0xff]
    %v118 = vld [vmem:[%s0 + $0x350] sm:$0xff]
    %v119 = vld [vmem:[%s0 + $0x358] sm:$0xff]
    %v120 = vld [vmem:[%s0 + $0x360] sm:$0xff]
    %v121 = vld [vmem:[%s0 + $0x368] sm:$0xff]
    %v122 = vld [vmem:[%s0 + $0x370] sm:$0xff]
    %v123 = vld [vmem:[%s0 + $0x378] sm:$0xff]
    %v124 = vld [vmem:[%s0 + $0x380] sm:$0xff]
    %v125 = vld [vmem:[%s0 + $0x388] sm:$0xff]
    %v126 = vld [vmem:[%s0 + $0x390] sm:$0xff]
    %v127 = vld [vmem:[%s0 + $0x398] sm:$0xff]
    %v128 = vld [vmem:[%s0 + $0x3a0] sm:$0xff]
    %v129 = vld [vmem:[%s0 + $0x3a8] sm:$0xff]
    %v130 = vld [vmem:[%s0 + $0x3b0] sm:$0xff]
    %v131 = vld [vmem:[%s0 + $0x3b8] sm:$0xff]
    %v132 = vld [vmem:[%s0 + $0x3c0] sm:$0xff]
    %v133 = vld [vmem:[%s0 + $0x3c8] sm:$0xff]
    %v134 = vld [vmem:[%s0 + $0x3d0] sm:$0xff]
    %v135 = vld [vmem:[%s0 + $0x3d8] sm:$0xff]
    %v136 = vld [vmem:[%s0 + $0x3e0] sm:$0xff]
    %v137 = vld [vmem:[%s0 + $0x3e8] sm:$0xff]
    %v138 = vld [vmem:[%s0 + $0x3f0] sm:$0xff]
    %v139 = vld [vmem:[%s0 + $0x3f8] sm:$0xff]
    %v140 = vld [vmem:[%s0 + $0x400] sm:$0xff]
    %v141 = vld [vmem:[%s0 + $0x408] sm:$0xff]
    %v142 = vld [vmem:[%s0 + $0x410] sm:$0xff]
    %v143 = vld [vmem:[%s0 + $0x418] sm:$0xff]
    %v144 = vld [vmem:[%s0 + $0x420] sm:$0xff]
    %v145 = vld [vmem:[%s0 + $0x428] sm:$0xff]
    %v146 = vld [vmem:[%s0 + $0x430] sm:$0xff]
    %v147 = vld [vmem:[%s0 + $0x438] sm:$0xff]
    %v148 = vld [vmem:[%s0 + $0x440] sm:$0xff]
    %v149 = vld [vmem:[%s0 + $0x448] sm:$0xff]
    %v150 = vld [vmem:[%s0 + $0x450] sm:$0xff]
    %v151 = vld [vmem:[%s0 + $0x458] sm:$0xff]
    %v152 = vld [vmem:[%s0 + $0x460] sm:$0xff]
    %v153 = vld [vmem:[%s0 + $0x468] sm:$0xff]
    %v154 = vld [vmem:[%s0 + $0x470] sm:$0xff]
    %v155 = vld [vmem:[%s0 + $0x478] sm:$0xff]
    %v156 = vld [vmem:[%s0 + $0x480] sm:$0xff]
    %v157 = vld [vmem:[%s0 + $0x488] sm:$0xff]
    %v158 = vld [vmem:[%s0 + $0x490] sm:$0xff]
    %v159 = vld [vmem:[%s0 + $0x498] sm:$0xff]
    %v160 = vld [vmem:[%s0 + $0x4a0] sm:$0xff]
    %v161 = vld [vmem:[%s0 + $0x4a8] sm:$0xff]
    %v162 = vld [vmem:[%s0 + $0x4b0] sm:$0xff]
    %v163 = vld [vmem:[%s0 + $0x4b8] sm:$0xff]
    %v164 = vld [vmem:[%s0 + $0x4c0] sm:$0xff]
    %v165 = vld [vmem:[%s0 + $0x4c8] sm:$0xff]
    %v166 = vld [vmem:[%s0 + $0x4d0] sm:$0xff]
    %v167 = vld [vmem:[%s0 + $0x4d8] sm:$0xff]
    %v168 = vld [vmem:[%s0 + $0x4e0] sm:$0xff]
    %v169 = vld [vmem:[%s0 + $0x4e8] sm:$0xff]
    %v170 = vld [vmem:[%s0 + $0x4f0] sm:$0xff]
    %v171 = vld [vmem:[%s0 + $0x4f8] sm:$0xff]
    %v172 = vld [vmem:[%s0 + $0x500] sm:$0xff]
    %v173 = vld [vmem:[%s0 + $0x508] sm:$0xff]
    %v174 = vld [vmem:[%s0 + $0x510] sm:$0xff]
    %v175 = vld [vmem:[%s0 + $0x518] sm:$0xff]
    %v176 = vld [vmem:[%s0 + $0x520] sm:$0xff]
    %v177 = vld [vmem:[%s0 + $0x528] sm:$0xff]
    %v178 = vld [vmem:[%s0 + $0x530] sm:$0xff]
    %v179 = vld [vmem:[%s0 + $0x538] sm:$0xff]
    %v180 = vld [vmem:[%s0 + $0x540] sm:$0xff]
    %v181 = vld [vmem:[%s0 + $0x548] sm:$0xff]
    %v182 = vld [vmem:[%s0 + $0x550] sm:$0xff]
    %v183 = vld [vmem:[%s0 + $0x558] sm:$0xff]
    %v184 = vld [vmem:[%s0 + $0x560] sm:$0xff]
    %v185 = vld [vmem:[%s0 + $0x568] sm:$0xff]
    %v186 = vld [vmem:[%s0 + $0x570] sm:$0xff]
    %v187 = vld [vmem:[%s0 + $0x578] sm:$0xff]
    %v188 = vld [vmem:[%s0 + $0x580] sm:$0xff]
    %v189 = vld [vmem:[%s0 + $0x588] sm:$0xff]
    %v190 = vld [vmem:[%s0 + $0x590] sm:$0xff]
    %v191 = vld [vmem:[%s0 + $0x598] sm:$0xff]
    %v192 = vld [vmem:[%s0 + $0x5a0] sm:$0xff]
    %v193 = vld [vmem:[%s0 + $0x5a8] sm:$0xff]
    %v194 = vld [vmem:[%s0 + $0x5b0] sm:$0xff]
    %v195 = vld [vmem:[%s0 + $0x5b8] sm:$0xff]
    %v196 = vld [vmem:[%s0 + $0x5c0] sm:$0xff]
    %v197 = vld [vmem:[%s0 + $0x5c8] sm:$0xff]
    %v198 = vld [vmem:[%s0 + $0x5d0] sm:$0xff]
    %v199 = vld [vmem:[%s0 + $0x5d8] sm:$0xff]
    %v200 = vld [vmem:[%s0 + $0x5e0] sm:$0xff]
    %v201 = vld [vmem:[%s0 + $0x5e8] sm:$0xff]
    %v202 = vld [vmem:[%s0 + $0x5f0] sm:$0xff]
    %v203 = vld [vmem:[%s0 + $0x5f8] sm:$0xff]
    %v204 = vld [vmem:[%s0 + $0x600] sm:$0xff]
    %v205 = vld [vmem:[%s0 + $0x608] sm:$0xff]
    %v206 = vld [vmem:[%s0 + $0x610] sm:$0xff]
    %v207 = vld [vmem:[%s0 + $0x618] sm:$0xff]
    %v208 = vld [vmem:[%s0 + $0x620] sm:$0xff]
    %v209 = vld [vmem:[%s0 + $0x628] sm:$0xff]
    %v210 = vld [vmem:[%s0 + $0x630] sm:$0xff]
    %v211 = vld [vmem:[%s0 + $0x638] sm:$0xff]
    %v212 = vld [vmem:[%s0 + $0x640] sm:$0xff]
    %v213 = vld [vmem:[%s0 + $0x648] sm:$0xff]
    %v214 = vld [vmem:[%s0 + $0x650] sm:$0xff]
    %v215 = vld [vmem:[%s0 + $0x658] sm:$0xff]
    %v216 = vld [vmem:[%s0 + $0x660] sm:$0xff]
    %v217 = vld [vmem:[%s0 + $0x668] sm:$0xff]
    %v218 = vld [vmem:[%s0 + $0x670] sm:$0xff]
    %v219 = vld [vmem:[%s0 + $0x678] sm:$0xff]
    %v220 = vld [vmem:[%s0 + $0x680] sm:$0xff]
    %v221 = vld [vmem:[%s0 + $0x688] sm:$0xff]
    %v222 = vld [vmem:[%s0 + $0x690] sm:$0xff]
    %v223 = vld [vmem:[%s0 + $0x698] sm:$0xff]
    %v224 = vld [vmem:[%s0 + $0x6a0] sm:$0xff]
    %v225 = vld [vmem:[%s0 + $0x6a8] sm:$0xff]
    %v226 = vld [vmem:[%s0 + $0x6b0] sm:$0xff]
    %v227 = vld [vmem:[%s0 + $0x6b8] sm:$0xff]
    %v228 = vld [vmem:[%s0 + $0x6c0] sm:$0xff]
    %v229 = vld [vmem:[%s0 + $0x6c8] sm:$0xff]
    %v230 = vld [vmem:[%s0 + $0x6d0] sm:$0xff]
    %v231 = vld [vmem:[%s0 + $0x6d8] sm:$0xff]
    %v232 = vld [vmem:[%s0 + $0x6e0] sm:$0xff]
    %v233 = vld [vmem:[%s0 + $0x6e8] sm:$0xff]
    %v234 = vld [vmem:[%s0 + $0x6f0] sm:$0xff]
    %v235 = vld [vmem:[%s0 + $0x6f8] sm:$0xff]
    %v236 = vld [vmem:[%s0 + $0x700] sm:$0xff]
    %v237 = vld [vmem:[%s0 + $0x708] sm:$0xff]
    %v238 = vld [vmem:[%s0 + $0x710] sm:$0xff]
    %v239 = vld [vmem:[%s0 + $0x718] sm:$0xff]
    %v240 = vld [vmem:[%s0 + $0x720] sm:$0xff]
    %v241 = vld [vmem:[%s0 + $0x728] sm:$0xff]
    %v242 = vld [vmem:[%s0 + $0x730] sm:$0xff]
    %v243 = vld [vmem:[%s0 + $0x738] sm:$0xff]
    %v244 = vld [vmem:[%s0 + $0x740] sm:$0xff]
    %v245 = vld [vmem:[%s0 + $0x748] sm:$0xff]
    %v246 = vld [vmem:[%s0 + $0x750] sm:$0xff]
    %v247 = vld [vmem:[%s0 + $0x758] sm:$0xff]
    %v248 = vld [vmem:[%s0 + $0x760] sm:$0xff]
    %v249 = vld [vmem:[%s0 + $0x768] sm:$0xff]
    %v250 = vld [vmem:[%s0 + $0x770] sm:$0xff]
    %v251 = vld [vmem:[%s0 + $0x778] sm:$0xff]
    %v252 = vld [vmem:[%s0 + $0x780] sm:$0xff]
    %v253 = vld [vmem:[%s0 + $0x788] sm:$0xff]
    %v254 = vld [vmem:[%s0 + $0x790] sm:$0xff]
    %v255 = vld [vmem:[%s0 + $0x798] sm:$0xff]
    %v256 = vld [vmem:[%s0 + $0x7a0] sm:$0xff]
    %v257 = vld [vmem:[%s0 + $0x7a8] sm:$0xff]
    %v258 = vld [vmem:[%s0 + $0x7b0] sm:$0xff]
    %v259 = vld [vmem:[%s0 + $0x7b8] sm:$0xff]
    %v260 = vld [vmem:[%s0 + $0x7c0] sm:$0xff]
    %v261 = vld [vmem:[%s0 + $0x7c8] sm:$0xff]
    %v262 = vld [vmem:[%s0 + $0x7d0] sm:$0xff]
    %v263 = vld [vmem:[%s0 + $0x7d8] sm:$0xff]
    %v264 = vmax.f32 %v12, 0.0
    %v265 = vmax.f32 %v13, 0.0
    %v266 = vmax.f32 %v14, 0.0
    %v267 = vmax.f32 %v15, 0.0
    %v268 = vmax.f32 %v16, 0.0
    %v269 = vmax.f32 %v17, 0.0
    %v270 = vmax.f32 %v18, 0.0
    %v271 = vmax.f32 %v19, 0.0
    %v272 = vmax.f32 %v20, 0.0
    %v273 = vmax.f32 %v21, 0.0
    %v274 = vmax.f32 %v22, 0.0
    %v275 = vmax.f32 %v23, 0.0
    %v276 = vmax.f32 %v24, 0.0
    %v277 = vmax.f32 %v25, 0.0
    %v278 = vmax.f32 %v26, 0.0
    %v279 = vmax.f32 %v27, 0.0
    %v280 = vmax.f32 %v28, 0.0
    %v281 = vmax.f32 %v29, 0.0
    %v282 = vmax.f32 %v30, 0.0
    %v283 = vmax.f32 %v31, 0.0
    %v284 = vmax.f32 %v32, 0.0
    %v285 = vmax.f32 %v33, 0.0
    %v286 = vmax.f32 %v34, 0.0
    %v287 = vmax.f32 %v35, 0.0
    %v288 = vmax.f32 %v36, 0.0
    %v289 = vmax.f32 %v37, 0.0
    %v290 = vmax.f32 %v38, 0.0
    %v291 = vmax.f32 %v39, 0.0
    %v292 = vmax.f32 %v40, 0.0
    %v293 = vmax.f32 %v41, 0.0
    %v294 = vmax.f32 %v42, 0.0
    %v295 = vmax.f32 %v43, 0.0
    %v296 = vmax.f32 %v44, 0.0
    %v297 = vmax.f32 %v45, 0.0
    %v298 = vmax.f32 %v46, 0.0
    %v299 = vmax.f32 %v47, 0.0
    %v300 = vmax.f32 %v48, 0.0
    %v301 = vmax.f32 %v49, 0.0
    %v302 = vmax.f32 %v50, 0.0
    %v303 = vmax.f32 %v51, 0.0
    %v304 = vmax.f32 %v52, 0.0
    %v305 = vmax.f32 %v53, 0.0
    %v306 = vmax.f32 %v54, 0.0
    %v307 = vmax.f32 %v55, 0.0
    %v308 = vmax.f32 %v56, 0.0
    %v309 = vmax.f32 %v57, 0.0
    %v310 = vmax.f32 %v58, 0.0
    %v311 = vmax.f32 %v59, 0.0
    %v312 = vmax.f32 %v60, 0.0
    %v313 = vmax.f32 %v61, 0.0
    %v314 = vmax.f32 %v62, 0.0
    %v315 = vmax.f32 %v63, 0.0
    %v316 = vmax.f32 %v64, 0.0
    %v317 = vmax.f32 %v65, 0.0
    %v318 = vmax.f32 %v66, 0.0
    %v319 = vmax.f32 %v67, 0.0
    %v320 = vmax.f32 %v68, 0.0
    %v321 = vmax.f32 %v69, 0.0
    %v322 = vmax.f32 %v70, 0.0
    %v323 = vmax.f32 %v71, 0.0
    %v324 = vmax.f32 %v72, 0.0
    %v325 = vmax.f32 %v73, 0.0
    %v326 = vmax.f32 %v74, 0.0
    %v327 = vmax.f32 %v75, 0.0
    %v328 = vmax.f32 %v76, 0.0
    %v329 = vmax.f32 %v77, 0.0
    %v330 = vmax.f32 %v78, 0.0
    %v331 = vmax.f32 %v79, 0.0
    %v332 = vmax.f32 %v80, 0.0
    %v333 = vmax.f32 %v81, 0.0
    %v334 = vmax.f32 %v82, 0.0
    %v335 = vmax.f32 %v83, 0.0
    %v336 = vmax.f32 %v84, 0.0
    %v337 = vmax.f32 %v85, 0.0
    %v338 = vmax.f32 %v86, 0.0
    %v339 = vmax.f32 %v87, 0.0
    %v340 = vmax.f32 %v88, 0.0
    %v341 = vmax.f32 %v89, 0.0
    %v342 = vmax.f32 %v90, 0.0
    %v343 = vmax.f32 %v91, 0.0
    %v344 = vmax.f32 %v92, 0.0
    %v345 = vmax.f32 %v93, 0.0
    %v346 = vmax.f32 %v94, 0.0
    %v347 = vmax.f32 %v95, 0.0
    %v348 = vmax.f32 %v96, 0.0
    %v349 = vmax.f32 %v97, 0.0
    %v350 = vmax.f32 %v98, 0.0
    %v351 = vmax.f32 %v99, 0.0
    %v352 = vmax.f32 %v100, 0.0
    %v353 = vmax.f32 %v101, 0.0
    %v354 = vmax.f32 %v102, 0.0
    %v355 = vmax.f32 %v103, 0.0
    %v356 = vmax.f32 %v104, 0.0
    %v357 = vmax.f32 %v105, 0.0
    %v358 = vmax.f32 %v106, 0.0
    %v359 = vmax.f32 %v107, 0.0
    %v360 = vmax.f32 %v108, 0.0
    %v361 = vmax.f32 %v109, 0.0
    %v362 = vmax.f32 %v110, 0.0
    %v363 = vmax.f32 %v111, 0.0
    %v364 = vmax.f32 %v112, 0.0
    %v365 = vmax.f32 %v113, 0.0
    %v366 = vmax.f32 %v114, 0.0
    %v367 = vmax.f32 %v115, 0.0
    %v368 = vmax.f32 %v116, 0.0
    %v369 = vmax.f32 %v117, 0.0
    %v370 = vmax.f32 %v118, 0.0
    %v371 = vmax.f32 %v119, 0.0
    %v372 = vmax.f32 %v120, 0.0
    %v373 = vmax.f32 %v121, 0.0
    %v374 = vmax.f32 %v122, 0.0
    %v375 = vmax.f32 %v123, 0.0
    %v376 = vmax.f32 %v124, 0.0
    %v377 = vmax.f32 %v125, 0.0
    %v378 = vmax.f32 %v126, 0.0
    %v379 = vmax.f32 %v127, 0.0
    %v380 = vmax.f32 %v128, 0.0
    %v381 = vmax.f32 %v129, 0.0
    %v382 = vmax.f32 %v130, 0.0
    %v383 = vmax.f32 %v131, 0.0
    %v384 = vmax.f32 %v132, 0.0
    %v385 = vmax.f32 %v133, 0.0
    %v386 = vmax.f32 %v134, 0.0
    %v387 = vmax.f32 %v135, 0.0
    %v388 = vmax.f32 %v136, 0.0
    %v389 = vmax.f32 %v137, 0.0
    %v390 = vmax.f32 %v138, 0.0
    %v391 = vmax.f32 %v139, 0.0
    %v392 = vmax.f32 %v140, 0.0
    %v393 = vmax.f32 %v141, 0.0
    %v394 = vmax.f32 %v142, 0.0
    %v395 = vmax.f32 %v143, 0.0
    %v396 = vmax.f32 %v144, 0.0
    %v397 = vmax.f32 %v145, 0.0
    %v398 = vmax.f32 %v146, 0.0
    %v399 = vmax.f32 %v147, 0.0
    %v400 = vmax.f32 %v148, 0.0
    %v401 = vmax.f32 %v149, 0.0
    %v402 = vmax.f32 %v150, 0.0
    %v403 = vmax.f32 %v151, 0.0
    %v404 = vmax.f32 %v152, 0.0
    %v405 = vmax.f32 %v153, 0.0
    %v406 = vmax.f32 %v154, 0.0
    %v407 = vmax.f32 %v155, 0.0
    %v408 = vmax.f32 %v156, 0.0
    %v409 = vmax.f32 %v157, 0.0
    %v410 = vmax.f32 %v158, 0.0
    %v411 = vmax.f32 %v159, 0.0
    %v412 = vmax.f32 %v160, 0.0
    %v413 = vmax.f32 %v161, 0.0
    %v414 = vmax.f32 %v162, 0.0
    %v415 = vmax.f32 %v163, 0.0
    %v416 = vmax.f32 %v164, 0.0
    %v417 = vmax.f32 %v165, 0.0
    %v418 = vmax.f32 %v166, 0.0
    %v419 = vmax.f32 %v167, 0.0
    %v420 = vmax.f32 %v168, 0.0
    %v421 = vmax.f32 %v169, 0.0
    %v422 = vmax.f32 %v170, 0.0
    %v423 = vmax.f32 %v171, 0.0
    %v424 = vmax.f32 %v172, 0.0
    %v425 = vmax.f32 %v173, 0.0
    %v426 = vmax.f32 %v174, 0.0
    %v427 = vmax.f32 %v175, 0.0
    %v428 = vmax.f32 %v176, 0.0
    %v429 = vmax.f32 %v177, 0.0
    %v430 = vmax.f32 %v178, 0.0
    %v431 = vmax.f32 %v179, 0.0
    %v432 = vmax.f32 %v180, 0.0
    %v433 = vmax.f32 %v181, 0.0
    %v434 = vmax.f32 %v182, 0.0
    %v435 = vmax.f32 %v183, 0.0
    %v436 = vmax.f32 %v184, 0.0
    %v437 = vmax.f32 %v185, 0.0
    %v438 = vmax.f32 %v186, 0.0
    %v439 = vmax.f32 %v187, 0.0
    %v440 = vmax.f32 %v188, 0.0
    %v441 = vmax.f32 %v189, 0.0
    %v442 = vmax.f32 %v190, 0.0
    %v443 = vmax.f32 %v191, 0.0
    %v444 = vmax.f32 %v192, 0.0
    %v445 = vmax.f32 %v193, 0.0
    %v446 = vmax.f32 %v194, 0.0
    %v447 = vmax.f32 %v195, 0.0
    %v448 = vmax.f32 %v196, 0.0
    %v449 = vmax.f32 %v197, 0.0
    %v450 = vmax.f32 %v198, 0.0
    %v451 = vmax.f32 %v199, 0.0
    %v452 = vmax.f32 %v200, 0.0
    %v453 = vmax.f32 %v201, 0.0
    %v454 = vmax.f32 %v202, 0.0
    %v455 = vmax.f32 %v203, 0.0
    %v456 = vmax.f32 %v204, 0.0
    %v457 = vmax.f32 %v205, 0.0
    %v458 = vmax.f32 %v206, 0.0
    %v459 = vmax.f32 %v207, 0.0
    %v460 = vmax.f32 %v208, 0.0
    %v461 = vmax.f32 %v209, 0.0
    %v462 = vmax.f32 %v210, 0.0
    %v463 = vmax.f32 %v211, 0.0
    %v464 = vmax.f32 %v212, 0.0
    %v465 = vmax.f32 %v213, 0.0
    %v466 = vmax.f32 %v214, 0.0
    %v467 = vmax.f32 %v215, 0.0
    %v468 = vmax.f32 %v216, 0.0
    %v469 = vmax.f32 %v217, 0.0
    %v470 = vmax.f32 %v218, 0.0
    %v471 = vmax.f32 %v219, 0.0
    %v472 = vmax.f32 %v220, 0.0
    %v473 = vmax.f32 %v221, 0.0
    %v474 = vmax.f32 %v222, 0.0
    %v475 = vmax.f32 %v223, 0.0
    %v476 = vmax.f32 %v224, 0.0
    %v477 = vmax.f32 %v225, 0.0
    %v478 = vmax.f32 %v226, 0.0
    %v479 = vmax.f32 %v227, 0.0
    %v480 = vmax.f32 %v228, 0.0
    %v481 = vmax.f32 %v229, 0.0
    %v482 = vmax.f32 %v230, 0.0
    %v483 = vmax.f32 %v231, 0.0
    %v484 = vmax.f32 %v232, 0.0
    %v485 = vmax.f32 %v233, 0.0
    %v486 = vmax.f32 %v234, 0.0
    %v487 = vmax.f32 %v235, 0.0
    %v488 = vmax.f32 %v236, 0.0
    %v489 = vmax.f32 %v237, 0.0
    %v490 = vmax.f32 %v238, 0.0
    %v491 = vmax.f32 %v239, 0.0
    %v492 = vmax.f32 %v240, 0.0
    %v493 = vmax.f32 %v241, 0.0
    %v494 = vmax.f32 %v242, 0.0
    %v495 = vmax.f32 %v243, 0.0
    %v496 = vmax.f32 %v244, 0.0
    %v497 = vmax.f32 %v245, 0.0
    %v498 = vmax.f32 %v246, 0.0
    %v499 = vmax.f32 %v247, 0.0
    %v500 = vmax.f32 %v248, 0.0
    %v501 = vmax.f32 %v249, 0.0
    %v502 = vmax.f32 %v250, 0.0
    %v503 = vmax.f32 %v251, 0.0
    %v504 = vmax.f32 %v252, 0.0
    %v505 = vmax.f32 %v253, 0.0
    %v506 = vmax.f32 %v254, 0.0
    %v507 = vmax.f32 %v255, 0.0
    %v508 = vmax.f32 %v256, 0.0
    %v509 = vmax.f32 %v257, 0.0
    %v510 = vmax.f32 %v258, 0.0
    %v511 = vmax.f32 %v259, 0.0
    %v512 = vmax.f32 %v260, 0.0
    %v513 = vmax.f32 %v261, 0.0
    %v514 = vmax.f32 %v262, 0.0
    %v515 = vmax.f32 %v263, 0.0
    %v516 = vld [vmem:[%s1] sm:$0xff]
    %v517 = vld [vmem:[%s1 + $0x8] sm:$0xff]
    %v518 = vld [vmem:[%s1 + $0x10] sm:$0xff]
    %v519 = vld [vmem:[%s1 + $0x18] sm:$0xff]
    %v520 = vld [vmem:[%s1 + $0x20] sm:$0xff]
    %v521 = vld [vmem:[%s1 + $0x28] sm:$0xff]
    %v522 = vld [vmem:[%s1 + $0x30] sm:$0xff]
    %v523 = vld [vmem:[%s1 + $0x38] sm:$0xff]
    %v524 = vld [vmem:[%s1 + $0x40] sm:$0xff]
    %v525 = vld [vmem:[%s1 + $0x48] sm:$0xff]
    %v526 = vld [vmem:[%s1 + $0x50] sm:$0xff]
    %v527 = vld [vmem:[%s1 + $0x58] sm:$0xff]
    %v528 = vld [vmem:[%s1 + $0x60] sm:$0xff]
    %v529 = vld [vmem:[%s1 + $0x68] sm:$0xff]
    %v530 = vld [vmem:[%s1 + $0x70] sm:$0xff]
    %v531 = vld [vmem:[%s1 + $0x78] sm:$0xff]
    %v532 = vld [vmem:[%s1 + $0x80] sm:$0xff]
    %v533 = vld [vmem:[%s1 + $0x88] sm:$0xff]
    %v534 = vld [vmem:[%s1 + $0x90] sm:$0xff]
    %v535 = vld [vmem:[%s1 + $0x98] sm:$0xff]
    %v536 = vld [vmem:[%s1 + $0xa0] sm:$0xff]
    %v537 = vld [vmem:[%s1 + $0xa8] sm:$0xff]
    %v538 = vld [vmem:[%s1 + $0xb0] sm:$0xff]
    %v539 = vld [vmem:[%s1 + $0xb8] sm:$0xff]
    %v540 = vld [vmem:[%s1 + $0xc0] sm:$0xff]
    %v541 = vld [vmem:[%s1 + $0xc8] sm:$0xff]
    %v542 = vld [vmem:[%s1 + $0xd0] sm:$0xff]
    %v543 = vld [vmem:[%s1 + $0xd8] sm:$0xff]
    %v544 = vld [vmem:[%s1 + $0xe0] sm:$0xff]
    %v545 = vld [vmem:[%s1 + $0xe8] sm:$0xff]
    %v546 = vld [vmem:[%s1 + $0xf0] sm:$0xff]
    %v547 = vld [vmem:[%s1 + $0xf8] sm:$0xff]
    %v548 = vld [vmem:[%s1 + $0x100] sm:$0xff]
    %v549 = vld [vmem:[%s1 + $0x108] sm:$0xff]
    %v550 = vld [vmem:[%s1 + $0x110] sm:$0xff]
    %v551 = vld [vmem:[%s1 + $0x118] sm:$0xff]
    %v552 = vld [vmem:[%s1 + $0x120] sm:$0xff]
    %v553 = vld [vmem:[%s1 + $0x128] sm:$0xff]
    %v554 = vld [vmem:[%s1 + $0x130] sm:$0xff]
    %v555 = vld [vmem:[%s1 + $0x138] sm:$0xff]
    %v556 = vld [vmem:[%s1 + $0x140] sm:$0xff]
    %v557 = vld [vmem:[%s1 + $0x148] sm:$0xff]
    %v558 = vld [vmem:[%s1 + $0x150] sm:$0xff]
    %v559 = vld [vmem:[%s1 + $0x158] sm:$0xff]
    %v560 = vld [vmem:[%s1 + $0x160] sm:$0xff]
    %v561 = vld [vmem:[%s1 + $0x168] sm:$0xff]
    %v562 = vld [vmem:[%s1 + $0x170] sm:$0xff]
    %v563 = vld [vmem:[%s1 + $0x178] sm:$0xff]
    %v564 = vld [vmem:[%s1 + $0x180] sm:$0xff]
    %v565 = vld [vmem:[%s1 + $0x188] sm:$0xff]
    %v566 = vld [vmem:[%s1 + $0x190] sm:$0xff]
    %v567 = vld [vmem:[%s1 + $0x198] sm:$0xff]
    %v568 = vld [vmem:[%s1 + $0x1a0] sm:$0xff]
    %v569 = vld [vmem:[%s1 + $0x1a8] sm:$0xff]
    %v570 = vld [vmem:[%s1 + $0x1b0] sm:$0xff]
    %v571 = vld [vmem:[%s1 + $0x1b8] sm:$0xff]
    %v572 = vld [vmem:[%s1 + $0x1c0] sm:$0xff]
    %v573 = vld [vmem:[%s1 + $0x1c8] sm:$0xff]
    %v574 = vld [vmem:[%s1 + $0x1d0] sm:$0xff]
    %v575 = vld [vmem:[%s1 + $0x1d8] sm:$0xff]
    %v576 = vld [vmem:[%s1 + $0x1e0] sm:$0xff]
    %v577 = vld [vmem:[%s1 + $0x1e8] sm:$0xff]
    %v578 = vld [vmem:[%s1 + $0x1f0] sm:$0xff]
    %v579 = vld [vmem:[%s1 + $0x1f8] sm:$0xff]
    %v580 = vld [vmem:[%s1 + $0x200] sm:$0xff]
    %v581 = vld [vmem:[%s1 + $0x208] sm:$0xff]
    %v582 = vld [vmem:[%s1 + $0x210] sm:$0xff]
    %v583 = vld [vmem:[%s1 + $0x218] sm:$0xff]
    %v584 = vld [vmem:[%s1 + $0x220] sm:$0xff]
    %v585 = vld [vmem:[%s1 + $0x228] sm:$0xff]
    %v586 = vld [vmem:[%s1 + $0x230] sm:$0xff]
    %v587 = vld [vmem:[%s1 + $0x238] sm:$0xff]
    %v588 = vld [vmem:[%s1 + $0x240] sm:$0xff]
    %v589 = vld [vmem:[%s1 + $0x248] sm:$0xff]
    %v590 = vld [vmem:[%s1 + $0x250] sm:$0xff]
    %v591 = vld [vmem:[%s1 + $0x258] sm:$0xff]
    %v592 = vld [vmem:[%s1 + $0x260] sm:$0xff]
    %v593 = vld [vmem:[%s1 + $0x268] sm:$0xff]
    %v594 = vld [vmem:[%s1 + $0x270] sm:$0xff]
    %v595 = vld [vmem:[%s1 + $0x278] sm:$0xff]
    %v596 = vld [vmem:[%s1 + $0x280] sm:$0xff]
    %v597 = vld [vmem:[%s1 + $0x288] sm:$0xff]
    %v598 = vld [vmem:[%s1 + $0x290] sm:$0xff]
    %v599 = vld [vmem:[%s1 + $0x298] sm:$0xff]
    %v600 = vld [vmem:[%s1 + $0x2a0] sm:$0xff]
    %v601 = vld [vmem:[%s1 + $0x2a8] sm:$0xff]
    %v602 = vld [vmem:[%s1 + $0x2b0] sm:$0xff]
    %v603 = vld [vmem:[%s1 + $0x2b8] sm:$0xff]
    %v604 = vld [vmem:[%s1 + $0x2c0] sm:$0xff]
    %v605 = vld [vmem:[%s1 + $0x2c8] sm:$0xff]
    %v606 = vld [vmem:[%s1 + $0x2d0] sm:$0xff]
    %v607 = vld [vmem:[%s1 + $0x2d8] sm:$0xff]
    %v608 = vld [vmem:[%s1 + $0x2e0] sm:$0xff]
    %v609 = vld [vmem:[%s1 + $0x2e8] sm:$0xff]
    %v610 = vld [vmem:[%s1 + $0x2f0] sm:$0xff]
    %v611 = vld [vmem:[%s1 + $0x2f8] sm:$0xff]
    %v612 = vld [vmem:[%s1 + $0x300] sm:$0xff]
    %v613 = vld [vmem:[%s1 + $0x308] sm:$0xff]
    %v614 = vld [vmem:[%s1 + $0x310] sm:$0xff]
    %v615 = vld [vmem:[%s1 + $0x318] sm:$0xff]
    %v616 = vld [vmem:[%s1 + $0x320] sm:$0xff]
    %v617 = vld [vmem:[%s1 + $0x328] sm:$0xff]
    %v618 = vld [vmem:[%s1 + $0x330] sm:$0xff]
    %v619 = vld [vmem:[%s1 + $0x338] sm:$0xff]
    %v620 = vld [vmem:[%s1 + $0x340] sm:$0xff]
    %v621 = vld [vmem:[%s1 + $0x348] sm:$0xff]
    %v622 = vld [vmem:[%s1 + $0x350] sm:$0xff]
    %v623 = vld [vmem:[%s1 + $0x358] sm:$0xff]
    %v624 = vld [vmem:[%s1 + $0x360] sm:$0xff]
    %v625 = vld [vmem:[%s1 + $0x368] sm:$0xff]
    %v626 = vld [vmem:[%s1 + $0x370] sm:$0xff]
    %v627 = vld [vmem:[%s1 + $0x378] sm:$0xff]
    %v628 = vld [vmem:[%s1 + $0x380] sm:$0xff]
    %v629 = vld [vmem:[%s1 + $0x388] sm:$0xff]
    %v630 = vld [vmem:[%s1 + $0x390] sm:$0xff]
    %v631 = vld [vmem:[%s1 + $0x398] sm:$0xff]
    %v632 = vld [vmem:[%s1 + $0x3a0] sm:$0xff]
    %v633 = vld [vmem:[%s1 + $0x3a8] sm:$0xff]
    %v634 = vld [vmem:[%s1 + $0x3b0] sm:$0xff]
    %v635 = vld [vmem:[%s1 + $0x3b8] sm:$0xff]
    %v636 = vld [vmem:[%s1 + $0x3c0] sm:$0xff]
    %v637 = vld [vmem:[%s1 + $0x3c8] sm:$0xff]
    %v638 = vld [vmem:[%s1 + $0x3d0] sm:$0xff]
    %v639 = vld [vmem:[%s1 + $0x3d8] sm:$0xff]
    %v640 = vld [vmem:[%s1 + $0x3e0] sm:$0xff]
    %v641 = vld [vmem:[%s1 + $0x3e8] sm:$0xff]
    %v642 = vld [vmem:[%s1 + $0x3f0] sm:$0xff]
    %v643 = vld [vmem:[%s1 + $0x3f8] sm:$0xff]
    %v644 = vld [vmem:[%s1 + $0x400] sm:$0xff]
    %v645 = vld [vmem:[%s1 + $0x408] sm:$0xff]
    %v646 = vld [vmem:[%s1 + $0x410] sm:$0xff]
    %v647 = vld [vmem:[%s1 + $0x418] sm:$0xff]
    %v648 = vld [vmem:[%s1 + $0x420] sm:$0xff]
    %v649 = vld [vmem:[%s1 + $0x428] sm:$0xff]
    %v650 = vld [vmem:[%s1 + $0x430] sm:$0xff]
    %v651 = vld [vmem:[%s1 + $0x438] sm:$0xff]
    %v652 = vld [vmem:[%s1 + $0x440] sm:$0xff]
    %v653 = vld [vmem:[%s1 + $0x448] sm:$0xff]
    %v654 = vld [vmem:[%s1 + $0x450] sm:$0xff]
    %v655 = vld [vmem:[%s1 + $0x458] sm:$0xff]
    %v656 = vld [vmem:[%s1 + $0x460] sm:$0xff]
    %v657 = vld [vmem:[%s1 + $0x468] sm:$0xff]
    %v658 = vld [vmem:[%s1 + $0x470] sm:$0xff]
    %v659 = vld [vmem:[%s1 + $0x478] sm:$0xff]
    %v660 = vld [vmem:[%s1 + $0x480] sm:$0xff]
    %v661 = vld [vmem:[%s1 + $0x488] sm:$0xff]
    %v662 = vld [vmem:[%s1 + $0x490] sm:$0xff]
    %v663 = vld [vmem:[%s1 + $0x498] sm:$0xff]
    %v664 = vld [vmem:[%s1 + $0x4a0] sm:$0xff]
    %v665 = vld [vmem:[%s1 + $0x4a8] sm:$0xff]
    %v666 = vld [vmem:[%s1 + $0x4b0] sm:$0xff]
    %v667 = vld [vmem:[%s1 + $0x4b8] sm:$0xff]
    %v668 = vld [vmem:[%s1 + $0x4c0] sm:$0xff]
    %v669 = vld [vmem:[%s1 + $0x4c8] sm:$0xff]
    %v670 = vld [vmem:[%s1 + $0x4d0] sm:$0xff]
    %v671 = vld [vmem:[%s1 + $0x4d8] sm:$0xff]
    %v672 = vld [vmem:[%s1 + $0x4e0] sm:$0xff]
    %v673 = vld [vmem:[%s1 + $0x4e8] sm:$0xff]
    %v674 = vld [vmem:[%s1 + $0x4f0] sm:$0xff]
    %v675 = vld [vmem:[%s1 + $0x4f8] sm:$0xff]
    %v676 = vld [vmem:[%s1 + $0x500] sm:$0xff]
    %v677 = vld [vmem:[%s1 + $0x508] sm:$0xff]
    %v678 = vld [vmem:[%s1 + $0x510] sm:$0xff]
    %v679 = vld [vmem:[%s1 + $0x518] sm:$0xff]
    %v680 = vld [vmem:[%s1 + $0x520] sm:$0xff]
    %v681 = vld [vmem:[%s1 + $0x528] sm:$0xff]
    %v682 = vld [vmem:[%s1 + $0x530] sm:$0xff]
    %v683 = vld [vmem:[%s1 + $0x538] sm:$0xff]
    %v684 = vld [vmem:[%s1 + $0x540] sm:$0xff]
    %v685 = vld [vmem:[%s1 + $0x548] sm:$0xff]
    %v686 = vld [vmem:[%s1 + $0x550] sm:$0xff]
    %v687 = vld [vmem:[%s1 + $0x558] sm:$0xff]
    %v688 = vld [vmem:[%s1 + $0x560] sm:$0xff]
    %v689 = vld [vmem:[%s1 + $0x568] sm:$0xff]
    %v690 = vld [vmem:[%s1 + $0x570] sm:$0xff]
    %v691 = vld [vmem:[%s1 + $0x578] sm:$0xff]
    %v692 = vld [vmem:[%s1 + $0x580] sm:$0xff]
    %v693 = vld [vmem:[%s1 + $0x588] sm:$0xff]
    %v694 = vld [vmem:[%s1 + $0x590] sm:$0xff]
    %v695 = vld [vmem:[%s1 + $0x598] sm:$0xff]
    %v696 = vld [vmem:[%s1 + $0x5a0] sm:$0xff]
    %v697 = vld [vmem:[%s1 + $0x5a8] sm:$0xff]
    %v698 = vld [vmem:[%s1 + $0x5b0] sm:$0xff]
    %v699 = vld [vmem:[%s1 + $0x5b8] sm:$0xff]
    %v700 = vld [vmem:[%s1 + $0x5c0] sm:$0xff]
    %v701 = vld [vmem:[%s1 + $0x5c8] sm:$0xff]
    %v702 = vld [vmem:[%s1 + $0x5d0] sm:$0xff]
    %v703 = vld [vmem:[%s1 + $0x5d8] sm:$0xff]
    %v704 = vld [vmem:[%s1 + $0x5e0] sm:$0xff]
    %v705 = vld [vmem:[%s1 + $0x5e8] sm:$0xff]
    %v706 = vld [vmem:[%s1 + $0x5f0] sm:$0xff]
    %v707 = vld [vmem:[%s1 + $0x5f8] sm:$0xff]
    %vm708 = vcmask 916480
    %v710 = vsel %vm708, %v523, 0
    %v713 = vsel %vm708, %v531, 0
    %v716 = vsel %vm708, %v539, 0
    %v719 = vsel %vm708, %v547, 0
    %v722 = vsel %vm708, %v555, 0
    %v725 = vsel %vm708, %v563, 0
    %v728 = vsel %vm708, %v571, 0
    %v731 = vsel %vm708, %v579, 0
    %v734 = vsel %vm708, %v587, 0
    %v737 = vsel %vm708, %v595, 0
    %v740 = vsel %vm708, %v603, 0
    %v743 = vsel %vm708, %v611, 0
    %v746 = vsel %vm708, %v619, 0
    %v749 = vsel %vm708, %v627, 0
    %v752 = vsel %vm708, %v635, 0
    %v755 = vsel %vm708, %v643, 0
    %v758 = vsel %vm708, %v651, 0
    %v761 = vsel %vm708, %v659, 0
    %v764 = vsel %vm708, %v667, 0
    %v767 = vsel %vm708, %v675, 0
    %v770 = vsel %vm708, %v683, 0
    %v773 = vsel %vm708, %v691, 0
    %v776 = vsel %vm708, %v699, 0
    %v779 = vsel %vm708, %v707, 0
    %781 = vmatprep.subr.mxu0 %v265
    %782 = vmatpush1.msra.mxu0 %v264
    %783 = vmatprep.subr.mxu0 %v267
    %784 = vmatpush1.msra.mxu0 %v266
    %785 = vmatprep.subr.mxu0 %v269
    %786 = vmatpush1.msra.mxu0 %v268
    %787 = vmatprep.subr.mxu0 %v271
    %788 = vmatpush1.msra.mxu0 %v270
    %789 = vmatprep.subr.mxu0 %v273
    %790 = vmatpush1.msra.mxu0 %v272
    %791 = vmatprep.subr.mxu0 %v275
    %792 = vmatpush1.msra.mxu0 %v274
    %793 = vmatprep.subr.mxu0 %v277
    %794 = vmatpush1.msra.mxu0 %v276
    %795 = vmatprep.subr.mxu0 %v279
    %796 = vmatpush1.msra.mxu0 %v278
    %797 = vmatprep.subr.mxu0 %v281
    %798 = vmatpush1.msra.mxu0 %v280
    %799 = vmatprep.subr.mxu0 %v283
    %800 = vmatpush1.msra.mxu0 %v282
    %801 = vmatprep.subr.mxu0 %v285
    %802 = vmatpush1.msra.mxu0 %v284
    %803 = vmatprep.subr.mxu0 %v287
    %804 = vmatpush1.msra.mxu0 %v286
    %805 = vmatprep.subr.mxu0 %v289
    %806 = vmatpush1.msra.mxu0 %v288
    %807 = vmatprep.subr.mxu0 %v291
    %808 = vmatpush1.msra.mxu0 %v290
    %809 = vmatprep.subr.mxu0 %v293
    %810 = vmatpush1.msra.mxu0 %v292
    %811 = vmatprep.subr.mxu0 %v295
    %812 = vmatpush1.msra.mxu0 %v294
    %813 = vmatprep.subr.mxu0 %v297
    %814 = vmatpush1.msra.mxu0 %v296
    %815 = vmatprep.subr.mxu0 %v299
    %816 = vmatpush1.msra.mxu0 %v298
    %817 = vmatprep.subr.mxu0 %v301
    %818 = vmatpush1.msra.mxu0 %v300
    %819 = vmatprep.subr.mxu0 %v303
    %820 = vmatpush1.msra.mxu0 %v302
    %821 = vmatprep.subr.mxu0 %v305
    %822 = vmatpush1.msra.mxu0 %v304
    %823 = vmatprep.subr.mxu0 %v307
    %824 = vmatpush1.msra.mxu0 %v306
    %825 = vmatprep.subr.mxu0 %v309
    %826 = vmatpush1.msra.mxu0 %v308
    %827 = vmatprep.subr.mxu0 %v311
    %828 = vmatpush1.msra.mxu0 %v310
    %829 = vmatprep.subr.mxu0 %v313
    %830 = vmatpush1.msra.mxu0 %v312
    %831 = vmatprep.subr.mxu0 %v315
    %832 = vmatpush1.msra.mxu0 %v314
    %833 = vmatprep.subr.mxu0 %v317
    %834 = vmatpush1.msra.mxu0 %v316
    %835 = vmatprep.subr.mxu0 %v319
    %836 = vmatpush1.msra.mxu0 %v318
    %837 = vmatprep.subr.mxu0 %v321
    %838 = vmatpush1.msra.mxu0 %v320
    %839 = vmatprep.subr.mxu0 %v323
    %840 = vmatpush1.msra.mxu0 %v322
    %841 = vmatprep.subr.mxu0 %v325
    %842 = vmatpush1.msra.mxu0 %v324
    %843 = vmatprep.subr.mxu0 %v327
    %844 = vmatpush1.msra.mxu0 %v326
    %845 = vmatprep.mubr.f32.mxu0 %v517
    %846 = vmatmul.mubr.f32.gmra.mrb[0].mxu0 %v516
    %v847 = vpop.f32.mrb[0].mxu0
    %v848 = vadd.f32 0.0, %v847
    %v849 = vpop.f32.mrb[0].mxu0
    %v850 = vadd.f32 0.0, %v849
    %851 = vmatprep.mubr.f32.mxu0 %v525
    %852 = vmatmul.mubr.f32.gmra.mrb[0].mxu0 %v524
    %v853 = vpop.f32.mrb[0].mxu0
    %v854 = vadd.f32 0.0, %v853
    %v855 = vpop.f32.mrb[0].mxu0
    %v856 = vadd.f32 0.0, %v855
    %857 = vmatprep.mubr.f32.mxu0 %v533
    %858 = vmatmul.mubr.f32.gmra.mrb[0].mxu0 %v532
    %v859 = vpop.f32.mrb[0].mxu0
    %v860 = vadd.f32 0.0, %v859
    %v861 = vpop.f32.mrb[0].mxu0
    %v862 = vadd.f32 0.0, %v861
    %863 = vmatprep.mubr.f32.mxu0 %v541
    %864 = vmatmul.mubr.f32.gmra.mrb[0].mxu0 %v540
    %v865 = vpop.f32.mrb[0].mxu0
    %v866 = vadd.f32 0.0, %v865
    %v867 = vpop.f32.mrb[0].mxu0
    %v868 = vadd.f32 0.0, %v867
    %869 = vmatprep.mubr.f32.mxu0 %v549
    %870 = vmatmul.mubr.f32.gmra.mrb[0].mxu0 %v548
    %v871 = vpop.f32.mrb[0].mxu0
    %v872 = vadd.f32 0.0, %v871
    %v873 = vpop.f32.mrb[0].mxu0
    %v874 = vadd.f32 0.0, %v873
    %875 = vmatprep.mubr.f32.mxu0 %v557
    %876 = vmatmul.mubr.f32.gmra.mrb[0].mxu0 %v556
    %v877 = vpop.f32.mrb[0].mxu0
    %v878 = vadd.f32 0.0, %v877
    %v879 = vpop.f32.mrb[0].mxu0
    %v880 = vadd.f32 0.0, %v879
    %881 = vmatprep.mubr.f32.mxu0 %v565
    %882 = vmatmul.mubr.f32.gmra.mrb[0].mxu0 %v564
    %v883 = vpop.f32.mrb[0].mxu0
    %v884 = vadd.f32 0.0, %v883
    %v885 = vpop.f32.mrb[0].mxu0
    %v886 = vadd.f32 0.0, %v885
    %887 = vmatprep.mubr.f32.mxu0 %v573
    %888 = vmatmul.mubr.f32.gmra.mrb[0].mxu0 %v572
    %v889 = vpop.f32.mrb[0].mxu0
    %v890 = vadd.f32 0.0, %v889
    %v891 = vpop.f32.mrb[0].mxu0
    %v892 = vadd.f32 0.0, %v891
    %893 = vmatprep.mubr.f32.mxu0 %v581
    %894 = vmatmul.mubr.f32.gmra.mrb[0].mxu0 %v580
    %v895 = vpop.f32.mrb[0].mxu0
    %v896 = vadd.f32 0.0, %v895
    %v897 = vpop.f32.mrb[0].mxu0
    %v898 = vadd.f32 0.0, %v897
    %899 = vmatprep.mubr.f32.mxu0 %v589
    %900 = vmatmul.mubr.f32.gmra.mrb[0].mxu0 %v588
    %v901 = vpop.f32.mrb[0].mxu0
    %v902 = vadd.f32 0.0, %v901
    %v903 = vpop.f32.mrb[0].mxu0
    %v904 = vadd.f32 0.0, %v903
    %905 = vmatprep.mubr.f32.mxu0 %v597
    %906 = vmatmul.mubr.f32.gmra.mrb[0].mxu0 %v596
    %v907 = vpop.f32.mrb[0].mxu0
    %v908 = vadd.f32 0.0, %v907
    %v909 = vpop.f32.mrb[0].mxu0
    %v910 = vadd.f32 0.0, %v909
    %911 = vmatprep.mubr.f32.mxu0 %v605
    %912 = vmatmul.mubr.f32.gmra.mrb[0].mxu0 %v604
    %v913 = vpop.f32.mrb[0].mxu0
    %v914 = vadd.f32 0.0, %v913
    %v915 = vpop.f32.mrb[0].mxu0
    %v916 = vadd.f32 0.0, %v915
    %917 = vmatprep.mubr.f32.mxu0 %v613
    %918 = vmatmul.mubr.f32.gmra.mrb[0].mxu0 %v612
    %v919 = vpop.f32.mrb[0].mxu0
    %v920 = vadd.f32 0.0, %v919
    %v921 = vpop.f32.mrb[0].mxu0
    %v922 = vadd.f32 0.0, %v921
    %923 = vmatprep.mubr.f32.mxu0 %v621
    %924 = vmatmul.mubr.f32.gmra.mrb[0].mxu0 %v620
    %v925 = vpop.f32.mrb[0].mxu0
    %v926 = vadd.f32 0.0, %v925
    %v927 = vpop.f32.mrb[0].mxu0
    %v928 = vadd.f32 0.0, %v927
    %929 = vmatprep.mubr.f32.mxu0 %v629
    %930 = vmatmul.mubr.f32.gmra.mrb[0].mxu0 %v628
    %v931 = vpop.f32.mrb[0].mxu0
    %v932 = vadd.f32 0.0, %v931
    %v933 = vpop.f32.mrb[0].mxu0
    %v934 = vadd.f32 0.0, %v933
    %935 = vmatprep.mubr.f32.mxu0 %v637
    %936 = vmatmul.mubr.f32.gmra.mrb[0].mxu0 %v636
    %v937 = vpop.f32.mrb[0].mxu0
    %v938 = vadd.f32 0.0, %v937
    %v939 = vpop.f32.mrb[0].mxu0
    %v940 = vadd.f32 0.0, %v939
    %941 = vmatprep.mubr.f32.mxu0 %v645
    %942 = vmatmul.mubr.f32.gmra.mrb[0].mxu0 %v644
    %v943 = vpop.f32.mrb[0].mxu0
    %v944 = vadd.f32 0.0, %v943
    %v945 = vpop.f32.mrb[0].mxu0
    %v946 = vadd.f32 0.0, %v945
    %947 = vmatprep.mubr.f32.mxu0 %v653
    %948 = vmatmul.mubr.f32.gmra.mrb[0].mxu0 %v652
    %v949 = vpop.f32.mrb[0].mxu0
    %v950 = vadd.f32 0.0, %v949
    %v951 = vpop.f32.mrb[0].mxu0
    %v952 = vadd.f32 0.0, %v951
    %953 = vmatprep.mubr.f32.mxu0 %v661
    %954 = vmatmul.mubr.f32.gmra.mrb[0].mxu0 %v660
    %v955 = vpop.f32.mrb[0].mxu0
    %v956 = vadd.f32 0.0, %v955
    %v957 = vpop.f32.mrb[0].mxu0
    %v958 = vadd.f32 0.0, %v957
    %959 = vmatprep.mubr.f32.mxu0 %v669
    %960 = vmatmul.mubr.f32.gmra.mrb[0].mxu0 %v668
    %v961 = vpop.f32.mrb[0].mxu0
    %v962 = vadd.f32 0.0, %v961
    %v963 = vpop.f32.mrb[0].mxu0
    %v964 = vadd.f32 0.0, %v963
    %965 = vmatprep.mubr.f32.mxu0 %v677
    %966 = vmatmul.mubr.f32.gmra.mrb[0].mxu0 %v676
    %v967 = vpop.f32.mrb[0].mxu0
    %v968 = vadd.f32 0.0, %v967
    %v969 = vpop.f32.mrb[0].mxu0
    %v970 = vadd.f32 0.0, %v969
    %971 = vmatprep.mubr.f32.mxu0 %v685
    %972 = vmatmul.mubr.f32.gmra.mrb[0].mxu0 %v684
    %v973 = vpop.f32.mrb[0].mxu0
    %v974 = vadd.f32 0.0, %v973
    %v975 = vpop.f32.mrb[0].mxu0
    %v976 = vadd.f32 0.0, %v975
    %977 = vmatprep.mubr.f32.mxu0 %v693
    %978 = vmatmul.mubr.f32.gmra.mrb[0].mxu0 %v692
    %v979 = vpop.f32.mrb[0].mxu0
    %v980 = vadd.f32 0.0, %v979
    %v981 = vpop.f32.mrb[0].mxu0
    %v982 = vadd.f32 0.0, %v981
    %983 = vmatprep.mubr.f32.mxu0 %v701
    %984 = vmatmul.mubr.f32.gmra.mrb[0].mxu0 %v700
    %v985 = vpop.f32.mrb[0].mxu0
    %v986 = vadd.f32 0.0, %v985
    %v987 = vpop.f32.mrb[0].mxu0
    %v988 = vadd.f32 0.0, %v987
    %989 = vdwg.mxu0
    %990 = vmatprep.subr.mxu0 %v329
    %991 = vmatpush1.msra.mxu0 %v328
    %992 = vmatprep.subr.mxu0 %v331
    %993 = vmatpush1.msra.mxu0 %v330
    %994 = vmatprep.subr.mxu0 %v333
    %995 = vmatpush1.msra.mxu0 %v332
    %996 = vmatprep.subr.mxu0 %v335
    %997 = vmatpush1.msra.mxu0 %v334
    %998 = vmatprep.subr.mxu0 %v337
    %999 = vmatpush1.msra.mxu0 %v336
    %1000 = vmatprep.subr.mxu0 %v339
    %1001 = vmatpush1.msra.mxu0 %v338
    %1002 = vmatprep.subr.mxu0 %v341
    %1003 = vmatpush1.msra.mxu0 %v340
    %1004 = vmatprep.subr.mxu0 %v343
    %1005 = vmatpush1.msra.mxu0 %v342
    %1006 = vmatprep.subr.mxu0 %v345
    %1007 = vmatpush1.msra.mxu0 %v344
    %1008 = vmatprep.subr.mxu0 %v347
    %1009 = vmatpush1.msra.mxu0 %v346
    %1010 = vmatprep.subr.mxu0 %v349
    %1011 = vmatpush1.msra.mxu0 %v348
    %1012 = vmatprep.subr.mxu0 %v351
    %1013 = vmatpush1.msra.mxu0 %v350
    %1014 = vmatprep.subr.mxu0 %v353
    %1015 = vmatpush1.msra.mxu0 %v352
    %1016 = vmatprep.subr.mxu0 %v355
    %1017 = vmatpush1.msra.mxu0 %v354
    %1018 = vmatprep.subr.mxu0 %v357
    %1019 = vmatpush1.msra.mxu0 %v356
    %1020 = vmatprep.subr.mxu0 %v359
    %1021 = vmatpush1.msra.mxu0 %v358
    %1022 = vmatprep.subr.mxu0 %v361
    %1023 = vmatpush1.msra.mxu0 %v360
    %1024 = vmatprep.subr.mxu0 %v363
    %1025 = vmatpush1.msra.mxu0 %v362
    %1026 = vmatprep.subr.mxu0 %v365
    %1027 = vmatpush1.msra.mxu0 %v364
    %1028 = vmatprep.subr.mxu0 %v367
    %1029 = vmatpush1.msra.mxu0 %v366
    %1030 = vmatprep.subr.mxu0 %v369
    %1031 = vmatpush1.msra.mxu0 %v368
    %1032 = vmatprep.subr.mxu0 %v371
    %1033 = vmatpush1.msra.mxu0 %v370
    %1034 = vmatprep.subr.mxu0 %v373
    %1035 = vmatpush1.msra.mxu0 %v372
    %1036 = vmatprep.subr.mxu0 %v375
    %1037 = vmatpush1.msra.mxu0 %v374
    %1038 = vmatprep.subr.mxu0 %v377
    %1039 = vmatpush1.msra.mxu0 %v376
    %1040 = vmatprep.subr.mxu0 %v379
    %1041 = vmatpush1.msra.mxu0 %v378
    %1042 = vmatprep.subr.mxu0 %v381
    %1043 = vmatpush1.msra.mxu0 %v380
    %1044 = vmatprep.subr.mxu0 %v383
    %1045 = vmatpush1.msra.mxu0 %v382
    %1046 = vmatprep.subr.mxu0 %v385
    %1047 = vmatpush1.msra.mxu0 %v384
    %1048 = vmatprep.subr.mxu0 %v387
    %1049 = vmatpush1.msra.mxu0 %v386
    %1050 = vmatprep.subr.mxu0 %v389
    %1051 = vmatpush1.msra.mxu0 %v388
    %1052 = vmatprep.subr.mxu0 %v391
    %1053 = vmatpush1.msra.mxu0 %v390
    %1054 = vmatprep.mubr.f32.mxu0 %v519
    %1055 = vmatmul.mubr.f32.gmra.mrb[0].mxu0 %v518
    %v1056 = vpop.f32.mrb[0].mxu0
    %v1057 = vadd.f32 %v848, %v1056
    %v1058 = vpop.f32.mrb[0].mxu0
    %v1059 = vadd.f32 %v850, %v1058
    %1060 = vmatprep.mubr.f32.mxu0 %v527
    %1061 = vmatmul.mubr.f32.gmra.mrb[0].mxu0 %v526
    %v1062 = vpop.f32.mrb[0].mxu0
    %v1063 = vadd.f32 %v854, %v1062
    %v1064 = vpop.f32.mrb[0].mxu0
    %v1065 = vadd.f32 %v856, %v1064
    %1066 = vmatprep.mubr.f32.mxu0 %v535
    %1067 = vmatmul.mubr.f32.gmra.mrb[0].mxu0 %v534
    %v1068 = vpop.f32.mrb[0].mxu0
    %v1069 = vadd.f32 %v860, %v1068
    %v1070 = vpop.f32.mrb[0].mxu0
    %v1071 = vadd.f32 %v862, %v1070
    %1072 = vmatprep.mubr.f32.mxu0 %v543
    %1073 = vmatmul.mubr.f32.gmra.mrb[0].mxu0 %v542
    %v1074 = vpop.f32.mrb[0].mxu0
    %v1075 = vadd.f32 %v866, %v1074
    %v1076 = vpop.f32.mrb[0].mxu0
    %v1077 = vadd.f32 %v868, %v1076
    %1078 = vmatprep.mubr.f32.mxu0 %v551
    %1079 = vmatmul.mubr.f32.gmra.mrb[0].mxu0 %v550
    %v1080 = vpop.f32.mrb[0].mxu0
    %v1081 = vadd.f32 %v872, %v1080
    %v1082 = vpop.f32.mrb[0].mxu0
    %v1083 = vadd.f32 %v874, %v1082
    %1084 = vmatprep.mubr.f32.mxu0 %v559
    %1085 = vmatmul.mubr.f32.gmra.mrb[0].mxu0 %v558
    %v1086 = vpop.f32.mrb[0].mxu0
    %v1087 = vadd.f32 %v878, %v1086
    %v1088 = vpop.f32.mrb[0].mxu0
    %v1089 = vadd.f32 %v880, %v1088
    %1090 = vmatprep.mubr.f32.mxu0 %v567
    %1091 = vmatmul.mubr.f32.gmra.mrb[0].mxu0 %v566
    %v1092 = vpop.f32.mrb[0].mxu0
    %v1093 = vadd.f32 %v884, %v1092
    %v1094 = vpop.f32.mrb[0].mxu0
    %v1095 = vadd.f32 %v886, %v1094
    %1096 = vmatprep.mubr.f32.mxu0 %v575
    %1097 = vmatmul.mubr.f32.gmra.mrb[0].mxu0 %v574
    %v1098 = vpop.f32.mrb[0].mxu0
    %v1099 = vadd.f32 %v890, %v1098
    %v1100 = vpop.f32.mrb[0].mxu0
    %v1101 = vadd.f32 %v892, %v1100
    %1102 = vmatprep.mubr.f32.mxu0 %v583
    %1103 = vmatmul.mubr.f32.gmra.mrb[0].mxu0 %v582
    %v1104 = vpop.f32.mrb[0].mxu0
    %v1105 = vadd.f32 %v896, %v1104
    %v1106 = vpop.f32.mrb[0].mxu0
    %v1107 = vadd.f32 %v898, %v1106
    %1108 = vmatprep.mubr.f32.mxu0 %v591
    %1109 = vmatmul.mubr.f32.gmra.mrb[0].mxu0 %v590
    %v1110 = vpop.f32.mrb[0].mxu0
    %v1111 = vadd.f32 %v902, %v1110
    %v1112 = vpop.f32.mrb[0].mxu0
    %v1113 = vadd.f32 %v904, %v1112
    %1114 = vmatprep.mubr.f32.mxu0 %v599
    %1115 = vmatmul.mubr.f32.gmra.mrb[0].mxu0 %v598
    %v1116 = vpop.f32.mrb[0].mxu0
    %v1117 = vadd.f32 %v908, %v1116
    %v1118 = vpop.f32.mrb[0].mxu0
    %v1119 = vadd.f32 %v910, %v1118
    %1120 = vmatprep.mubr.f32.mxu0 %v607
    %1121 = vmatmul.mubr.f32.gmra.mrb[0].mxu0 %v606
    %v1122 = vpop.f32.mrb[0].mxu0
    %v1123 = vadd.f32 %v914, %v1122
    %v1124 = vpop.f32.mrb[0].mxu0
    %v1125 = vadd.f32 %v916, %v1124
    %1126 = vmatprep.mubr.f32.mxu0 %v615
    %1127 = vmatmul.mubr.f32.gmra.mrb[0].mxu0 %v614
    %v1128 = vpop.f32.mrb[0].mxu0
    %v1129 = vadd.f32 %v920, %v1128
    %v1130 = vpop.f32.mrb[0].mxu0
    %v1131 = vadd.f32 %v922, %v1130
    %1132 = vmatprep.mubr.f32.mxu0 %v623
    %1133 = vmatmul.mubr.f32.gmra.mrb[0].mxu0 %v622
    %v1134 = vpop.f32.mrb[0].mxu0
    %v1135 = vadd.f32 %v926, %v1134
    %v1136 = vpop.f32.mrb[0].mxu0
    %v1137 = vadd.f32 %v928, %v1136
    %1138 = vmatprep.mubr.f32.mxu0 %v631
    %1139 = vmatmul.mubr.f32.gmra.mrb[0].mxu0 %v630
    %v1140 = vpop.f32.mrb[0].mxu0
    %v1141 = vadd.f32 %v932, %v1140
    %v1142 = vpop.f32.mrb[0].mxu0
    %v1143 = vadd.f32 %v934, %v1142
    %1144 = vmatprep.mubr.f32.mxu0 %v639
    %1145 = vmatmul.mubr.f32.gmra.mrb[0].mxu0 %v638
    %v1146 = vpop.f32.mrb[0].mxu0
    %v1147 = vadd.f32 %v938, %v1146
    %v1148 = vpop.f32.mrb[0].mxu0
    %v1149 = vadd.f32 %v940, %v1148
    %1150 = vmatprep.mubr.f32.mxu0 %v647
    %1151 = vmatmul.mubr.f32.gmra.mrb[0].mxu0 %v646
    %v1152 = vpop.f32.mrb[0].mxu0
    %v1153 = vadd.f32 %v944, %v1152
    %v1154 = vpop.f32.mrb[0].mxu0
    %v1155 = vadd.f32 %v946, %v1154
    %1156 = vmatprep.mubr.f32.mxu0 %v655
    %1157 = vmatmul.mubr.f32.gmra.mrb[0].mxu0 %v654
    %v1158 = vpop.f32.mrb[0].mxu0
    %v1159 = vadd.f32 %v950, %v1158
    %v1160 = vpop.f32.mrb[0].mxu0
    %v1161 = vadd.f32 %v952, %v1160
    %1162 = vmatprep.mubr.f32.mxu0 %v663
    %1163 = vmatmul.mubr.f32.gmra.mrb[0].mxu0 %v662
    %v1164 = vpop.f32.mrb[0].mxu0
    %v1165 = vadd.f32 %v956, %v1164
    %v1166 = vpop.f32.mrb[0].mxu0
    %v1167 = vadd.f32 %v958, %v1166
    %1168 = vmatprep.mubr.f32.mxu0 %v671
    %1169 = vmatmul.mubr.f32.gmra.mrb[0].mxu0 %v670
    %v1170 = vpop.f32.mrb[0].mxu0
    %v1171 = vadd.f32 %v962, %v1170
    %v1172 = vpop.f32.mrb[0].mxu0
    %v1173 = vadd.f32 %v964, %v1172
    %1174 = vmatprep.mubr.f32.mxu0 %v679
    %1175 = vmatmul.mubr.f32.gmra.mrb[0].mxu0 %v678
    %v1176 = vpop.f32.mrb[0].mxu0
    %v1177 = vadd.f32 %v968, %v1176
    %v1178 = vpop.f32.mrb[0].mxu0
    %v1179 = vadd.f32 %v970, %v1178
    %1180 = vmatprep.mubr.f32.mxu0 %v687
    %1181 = vmatmul.mubr.f32.gmra.mrb[0].mxu0 %v686
    %v1182 = vpop.f32.mrb[0].mxu0
    %v1183 = vadd.f32 %v974, %v1182
    %v1184 = vpop.f32.mrb[0].mxu0
    %v1185 = vadd.f32 %v976, %v1184
    %1186 = vmatprep.mubr.f32.mxu0 %v695
    %1187 = vmatmul.mubr.f32.gmra.mrb[0].mxu0 %v694
    %v1188 = vpop.f32.mrb[0].mxu0
    %v1189 = vadd.f32 %v980, %v1188
    %v1190 = vpop.f32.mrb[0].mxu0
    %v1191 = vadd.f32 %v982, %v1190
    %1192 = vmatprep.mubr.f32.mxu0 %v703
    %1193 = vmatmul.mubr.f32.gmra.mrb[0].mxu0 %v702
    %v1194 = vpop.f32.mrb[0].mxu0
    %v1195 = vadd.f32 %v986, %v1194
    %v1196 = vpop.f32.mrb[0].mxu0
    %v1197 = vadd.f32 %v988, %v1196
    %1198 = vdwg.mxu0
    %1199 = vmatprep.subr.mxu0 %v393
    %1200 = vmatpush1.msra.mxu0 %v392
    %1201 = vmatprep.subr.mxu0 %v395
    %1202 = vmatpush1.msra.mxu0 %v394
    %1203 = vmatprep.subr.mxu0 %v397
    %1204 = vmatpush1.msra.mxu0 %v396
    %1205 = vmatprep.subr.mxu0 %v399
    %1206 = vmatpush1.msra.mxu0 %v398
    %1207 = vmatprep.subr.mxu0 %v401
    %1208 = vmatpush1.msra.mxu0 %v400
    %1209 = vmatprep.subr.mxu0 %v403
    %1210 = vmatpush1.msra.mxu0 %v402
    %1211 = vmatprep.subr.mxu0 %v405
    %1212 = vmatpush1.msra.mxu0 %v404
    %1213 = vmatprep.subr.mxu0 %v407
    %1214 = vmatpush1.msra.mxu0 %v406
    %1215 = vmatprep.subr.mxu0 %v409
    %1216 = vmatpush1.msra.mxu0 %v408
    %1217 = vmatprep.subr.mxu0 %v411
    %1218 = vmatpush1.msra.mxu0 %v410
    %1219 = vmatprep.subr.mxu0 %v413
    %1220 = vmatpush1.msra.mxu0 %v412
    %1221 = vmatprep.subr.mxu0 %v415
    %1222 = vmatpush1.msra.mxu0 %v414
    %1223 = vmatprep.subr.mxu0 %v417
    %1224 = vmatpush1.msra.mxu0 %v416
    %1225 = vmatprep.subr.mxu0 %v419
    %1226 = vmatpush1.msra.mxu0 %v418
    %1227 = vmatprep.subr.mxu0 %v421
    %1228 = vmatpush1.msra.mxu0 %v420
    %1229 = vmatprep.subr.mxu0 %v423
    %1230 = vmatpush1.msra.mxu0 %v422
    %1231 = vmatprep.subr.mxu0 %v425
    %1232 = vmatpush1.msra.mxu0 %v424
    %1233 = vmatprep.subr.mxu0 %v427
    %1234 = vmatpush1.msra.mxu0 %v426
    %1235 = vmatprep.subr.mxu0 %v429
    %1236 = vmatpush1.msra.mxu0 %v428
    %1237 = vmatprep.subr.mxu0 %v431
    %1238 = vmatpush1.msra.mxu0 %v430
    %1239 = vmatprep.subr.mxu0 %v433
    %1240 = vmatpush1.msra.mxu0 %v432
    %1241 = vmatprep.subr.mxu0 %v435
    %1242 = vmatpush1.msra.mxu0 %v434
    %1243 = vmatprep.subr.mxu0 %v437
    %1244 = vmatpush1.msra.mxu0 %v436
    %1245 = vmatprep.subr.mxu0 %v439
    %1246 = vmatpush1.msra.mxu0 %v438
    %1247 = vmatprep.subr.mxu0 %v441
    %1248 = vmatpush1.msra.mxu0 %v440
    %1249 = vmatprep.subr.mxu0 %v443
    %1250 = vmatpush1.msra.mxu0 %v442
    %1251 = vmatprep.subr.mxu0 %v445
    %1252 = vmatpush1.msra.mxu0 %v444
    %1253 = vmatprep.subr.mxu0 %v447
    %1254 = vmatpush1.msra.mxu0 %v446
    %1255 = vmatprep.subr.mxu0 %v449
    %1256 = vmatpush1.msra.mxu0 %v448
    %1257 = vmatprep.subr.mxu0 %v451
    %1258 = vmatpush1.msra.mxu0 %v450
    %1259 = vmatprep.subr.mxu0 %v453
    %1260 = vmatpush1.msra.mxu0 %v452
    %1261 = vmatprep.subr.mxu0 %v455
    %1262 = vmatpush1.msra.mxu0 %v454
    %1263 = vmatprep.mubr.f32.mxu0 %v521
    %1264 = vmatmul.mubr.f32.gmra.mrb[0].mxu0 %v520
    %v1265 = vpop.f32.mrb[0].mxu0
    %v1266 = vadd.f32 %v1057, %v1265
    %v1267 = vpop.f32.mrb[0].mxu0
    %v1268 = vadd.f32 %v1059, %v1267
    %1269 = vmatprep.mubr.f32.mxu0 %v529
    %1270 = vmatmul.mubr.f32.gmra.mrb[0].mxu0 %v528
    %v1271 = vpop.f32.mrb[0].mxu0
    %v1272 = vadd.f32 %v1063, %v1271
    %v1273 = vpop.f32.mrb[0].mxu0
    %v1274 = vadd.f32 %v1065, %v1273
    %1275 = vmatprep.mubr.f32.mxu0 %v537
    %1276 = vmatmul.mubr.f32.gmra.mrb[0].mxu0 %v536
    %v1277 = vpop.f32.mrb[0].mxu0
    %v1278 = vadd.f32 %v1069, %v1277
    %v1279 = vpop.f32.mrb[0].mxu0
    %v1280 = vadd.f32 %v1071, %v1279
    %1281 = vmatprep.mubr.f32.mxu0 %v545
    %1282 = vmatmul.mubr.f32.gmra.mrb[0].mxu0 %v544
    %v1283 = vpop.f32.mrb[0].mxu0
    %v1284 = vadd.f32 %v1075, %v1283
    %v1285 = vpop.f32.mrb[0].mxu0
    %v1286 = vadd.f32 %v1077, %v1285
    %1287 = vmatprep.mubr.f32.mxu0 %v553
    %1288 = vmatmul.mubr.f32.gmra.mrb[0].mxu0 %v552
    %v1289 = vpop.f32.mrb[0].mxu0
    %v1290 = vadd.f32 %v1081, %v1289
    %v1291 = vpop.f32.mrb[0].mxu0
    %v1292 = vadd.f32 %v1083, %v1291
    %1293 = vmatprep.mubr.f32.mxu0 %v561
    %1294 = vmatmul.mubr.f32.gmra.mrb[0].mxu0 %v560
    %v1295 = vpop.f32.mrb[0].mxu0
    %v1296 = vadd.f32 %v1087, %v1295
    %v1297 = vpop.f32.mrb[0].mxu0
    %v1298 = vadd.f32 %v1089, %v1297
    %1299 = vmatprep.mubr.f32.mxu0 %v569
    %1300 = vmatmul.mubr.f32.gmra.mrb[0].mxu0 %v568
    %v1301 = vpop.f32.mrb[0].mxu0
    %v1302 = vadd.f32 %v1093, %v1301
    %v1303 = vpop.f32.mrb[0].mxu0
    %v1304 = vadd.f32 %v1095, %v1303
    %1305 = vmatprep.mubr.f32.mxu0 %v577
    %1306 = vmatmul.mubr.f32.gmra.mrb[0].mxu0 %v576
    %v1307 = vpop.f32.mrb[0].mxu0
    %v1308 = vadd.f32 %v1099, %v1307
    %v1309 = vpop.f32.mrb[0].mxu0
    %v1310 = vadd.f32 %v1101, %v1309
    %1311 = vmatprep.mubr.f32.mxu0 %v585
    %1312 = vmatmul.mubr.f32.gmra.mrb[0].mxu0 %v584
    %v1313 = vpop.f32.mrb[0].mxu0
    %v1314 = vadd.f32 %v1105, %v1313
    %v1315 = vpop.f32.mrb[0].mxu0
    %v1316 = vadd.f32 %v1107, %v1315
    %1317 = vmatprep.mubr.f32.mxu0 %v593
    %1318 = vmatmul.mubr.f32.gmra.mrb[0].mxu0 %v592
    %v1319 = vpop.f32.mrb[0].mxu0
    %v1320 = vadd.f32 %v1111, %v1319
    %v1321 = vpop.f32.mrb[0].mxu0
    %v1322 = vadd.f32 %v1113, %v1321
    %1323 = vmatprep.mubr.f32.mxu0 %v601
    %1324 = vmatmul.mubr.f32.gmra.mrb[0].mxu0 %v600
    %v1325 = vpop.f32.mrb[0].mxu0
    %v1326 = vadd.f32 %v1117, %v1325
    %v1327 = vpop.f32.mrb[0].mxu0
    %v1328 = vadd.f32 %v1119, %v1327
    %1329 = vmatprep.mubr.f32.mxu0 %v609
    %1330 = vmatmul.mubr.f32.gmra.mrb[0].mxu0 %v608
    %v1331 = vpop.f32.mrb[0].mxu0
    %v1332 = vadd.f32 %v1123, %v1331
    %v1333 = vpop.f32.mrb[0].mxu0
    %v1334 = vadd.f32 %v1125, %v1333
    %1335 = vmatprep.mubr.f32.mxu0 %v617
    %1336 = vmatmul.mubr.f32.gmra.mrb[0].mxu0 %v616
    %v1337 = vpop.f32.mrb[0].mxu0
    %v1338 = vadd.f32 %v1129, %v1337
    %v1339 = vpop.f32.mrb[0].mxu0
    %v1340 = vadd.f32 %v1131, %v1339
    %1341 = vmatprep.mubr.f32.mxu0 %v625
    %1342 = vmatmul.mubr.f32.gmra.mrb[0].mxu0 %v624
    %v1343 = vpop.f32.mrb[0].mxu0
    %v1344 = vadd.f32 %v1135, %v1343
    %v1345 = vpop.f32.mrb[0].mxu0
    %v1346 = vadd.f32 %v1137, %v1345
    %1347 = vmatprep.mubr.f32.mxu0 %v633
    %1348 = vmatmul.mubr.f32.gmra.mrb[0].mxu0 %v632
    %v1349 = vpop.f32.mrb[0].mxu0
    %v1350 = vadd.f32 %v1141, %v1349
    %v1351 = vpop.f32.mrb[0].mxu0
    %v1352 = vadd.f32 %v1143, %v1351
    %1353 = vmatprep.mubr.f32.mxu0 %v641
    %1354 = vmatmul.mubr.f32.gmra.mrb[0].mxu0 %v640
    %v1355 = vpop.f32.mrb[0].mxu0
    %v1356 = vadd.f32 %v1147, %v1355
    %v1357 = vpop.f32.mrb[0].mxu0
    %v1358 = vadd.f32 %v1149, %v1357
    %1359 = vmatprep.mubr.f32.mxu0 %v649
    %1360 = vmatmul.mubr.f32.gmra.mrb[0].mxu0 %v648
    %v1361 = vpop.f32.mrb[0].mxu0
    %v1362 = vadd.f32 %v1153, %v1361
    %v1363 = vpop.f32.mrb[0].mxu0
    %v1364 = vadd.f32 %v1155, %v1363
    %1365 = vmatprep.mubr.f32.mxu0 %v657
    %1366 = vmatmul.mubr.f32.gmra.mrb[0].mxu0 %v656
    %v1367 = vpop.f32.mrb[0].mxu0
    %v1368 = vadd.f32 %v1159, %v1367
    %v1369 = vpop.f32.mrb[0].mxu0
    %v1370 = vadd.f32 %v1161, %v1369
    %1371 = vmatprep.mubr.f32.mxu0 %v665
    %1372 = vmatmul.mubr.f32.gmra.mrb[0].mxu0 %v664
    %v1373 = vpop.f32.mrb[0].mxu0
    %v1374 = vadd.f32 %v1165, %v1373
    %v1375 = vpop.f32.mrb[0].mxu0
    %v1376 = vadd.f32 %v1167, %v1375
    %1377 = vmatprep.mubr.f32.mxu0 %v673
    %1378 = vmatmul.mubr.f32.gmra.mrb[0].mxu0 %v672
    %v1379 = vpop.f32.mrb[0].mxu0
    %v1380 = vadd.f32 %v1171, %v1379
    %v1381 = vpop.f32.mrb[0].mxu0
    %v1382 = vadd.f32 %v1173, %v1381
    %1383 = vmatprep.mubr.f32.mxu0 %v681
    %1384 = vmatmul.mubr.f32.gmra.mrb[0].mxu0 %v680
    %v1385 = vpop.f32.mrb[0].mxu0
    %v1386 = vadd.f32 %v1177, %v1385
    %v1387 = vpop.f32.mrb[0].mxu0
    %v1388 = vadd.f32 %v1179, %v1387
    %1389 = vmatprep.mubr.f32.mxu0 %v689
    %1390 = vmatmul.mubr.f32.gmra.mrb[0].mxu0 %v688
    %v1391 = vpop.f32.mrb[0].mxu0
    %v1392 = vadd.f32 %v1183, %v1391
    %v1393 = vpop.f32.mrb[0].mxu0
    %v1394 = vadd.f32 %v1185, %v1393
    %1395 = vmatprep.mubr.f32.mxu0 %v697
    %1396 = vmatmul.mubr.f32.gmra.mrb[0].mxu0 %v696
    %v1397 = vpop.f32.mrb[0].mxu0
    %v1398 = vadd.f32 %v1189, %v1397
    %v1399 = vpop.f32.mrb[0].mxu0
    %v1400 = vadd.f32 %v1191, %v1399
    %1401 = vmatprep.mubr.f32.mxu0 %v705
    %1402 = vmatmul.mubr.f32.gmra.mrb[0].mxu0 %v704
    %v1403 = vpop.f32.mrb[0].mxu0
    %v1404 = vadd.f32 %v1195, %v1403
    %v1405 = vpop.f32.mrb[0].mxu0
    %v1406 = vadd.f32 %v1197, %v1405
    %1407 = vdwg.mxu0
    %1408 = vmatprep.subr.mxu0 %v457
    %1409 = vmatpush1.msra.mxu0 %v456
    %1410 = vmatprep.subr.mxu0 %v459
    %1411 = vmatpush1.msra.mxu0 %v458
    %1412 = vmatprep.subr.mxu0 %v461
    %1413 = vmatpush1.msra.mxu0 %v460
    %1414 = vmatprep.subr.mxu0 %v463
    %1415 = vmatpush1.msra.mxu0 %v462
    %1416 = vmatprep.subr.mxu0 %v465
    %1417 = vmatpush1.msra.mxu0 %v464
    %1418 = vmatprep.subr.mxu0 %v467
    %1419 = vmatpush1.msra.mxu0 %v466
    %1420 = vmatprep.subr.mxu0 %v469
    %1421 = vmatpush1.msra.mxu0 %v468
    %1422 = vmatprep.subr.mxu0 %v471
    %1423 = vmatpush1.msra.mxu0 %v470
    %1424 = vmatprep.subr.mxu0 %v473
    %1425 = vmatpush1.msra.mxu0 %v472
    %1426 = vmatprep.subr.mxu0 %v475
    %1427 = vmatpush1.msra.mxu0 %v474
    %1428 = vmatprep.subr.mxu0 %v477
    %1429 = vmatpush1.msra.mxu0 %v476
    %1430 = vmatprep.subr.mxu0 %v479
    %1431 = vmatpush1.msra.mxu0 %v478
    %1432 = vmatprep.subr.mxu0 %v481
    %1433 = vmatpush1.msra.mxu0 %v480
    %1434 = vmatprep.subr.mxu0 %v483
    %1435 = vmatpush1.msra.mxu0 %v482
    %1436 = vmatprep.subr.mxu0 %v485
    %1437 = vmatpush1.msra.mxu0 %v484
    %1438 = vmatprep.subr.mxu0 %v487
    %1439 = vmatpush1.msra.mxu0 %v486
    %1440 = vmatprep.subr.mxu0 %v489
    %1441 = vmatpush1.msra.mxu0 %v488
    %1442 = vmatprep.subr.mxu0 %v491
    %1443 = vmatpush1.msra.mxu0 %v490
    %1444 = vmatprep.subr.mxu0 %v493
    %1445 = vmatpush1.msra.mxu0 %v492
    %1446 = vmatprep.subr.mxu0 %v495
    %1447 = vmatpush1.msra.mxu0 %v494
    %1448 = vmatprep.subr.mxu0 %v497
    %1449 = vmatpush1.msra.mxu0 %v496
    %1450 = vmatprep.subr.mxu0 %v499
    %1451 = vmatpush1.msra.mxu0 %v498
    %1452 = vmatprep.subr.mxu0 %v501
    %1453 = vmatpush1.msra.mxu0 %v500
    %1454 = vmatprep.subr.mxu0 %v503
    %1455 = vmatpush1.msra.mxu0 %v502
    %1456 = vmatprep.subr.mxu0 %v505
    %1457 = vmatpush1.msra.mxu0 %v504
    %1458 = vmatprep.subr.mxu0 %v507
    %1459 = vmatpush1.msra.mxu0 %v506
    %1460 = vmatprep.subr.mxu0 %v509
    %1461 = vmatpush1.msra.mxu0 %v508
    %1462 = vmatprep.subr.mxu0 %v511
    %1463 = vmatpush1.msra.mxu0 %v510
    %1464 = vmatprep.subr.mxu0 %v513
    %1465 = vmatpush1.msra.mxu0 %v512
    %1466 = vmatprep.subr.mxu0 %v515
    %1467 = vmatpush1.msra.mxu0 %v514
    %1468 = vmatprep.subr.mxu0 0.0
    %1469 = vmatpush1.msra.mxu0 0.0
    %1470 = vmatprep.subr.mxu0 0.0
    %1471 = vmatpush1.msra.mxu0 0.0
    %1472 = vmatprep.mubr.f32.mxu0 %v710
    %1473 = vmatmul.mubr.f32.gmra.mrb[0].mxu0 %v522
    %v1474 = vpop.f32.mrb[0].mxu0
    %v1475 = vadd.f32 %v1266, %v1474
    %v1476 = vpop.f32.mrb[0].mxu0
    %v1477 = vadd.f32 %v1268, %v1476
    %1478 = vmatprep.mubr.f32.mxu0 %v713
    %1479 = vmatmul.mubr.f32.gmra.mrb[0].mxu0 %v530
    %v1480 = vpop.f32.mrb[0].mxu0
    %v1481 = vadd.f32 %v1272, %v1480
    %v1482 = vpop.f32.mrb[0].mxu0
    %v1483 = vadd.f32 %v1274, %v1482
    %1484 = vmatprep.mubr.f32.mxu0 %v716
    %1485 = vmatmul.mubr.f32.gmra.mrb[0].mxu0 %v538
    %v1486 = vpop.f32.mrb[0].mxu0
    %v1487 = vadd.f32 %v1278, %v1486
    %v1488 = vpop.f32.mrb[0].mxu0
    %v1489 = vadd.f32 %v1280, %v1488
    %1490 = vmatprep.mubr.f32.mxu0 %v719
    %1491 = vmatmul.mubr.f32.gmra.mrb[0].mxu0 %v546
    %v1492 = vpop.f32.mrb[0].mxu0
    %v1493 = vadd.f32 %v1284, %v1492
    %v1494 = vpop.f32.mrb[0].mxu0
    %v1495 = vadd.f32 %v1286, %v1494
    %1496 = vmatprep.mubr.f32.mxu0 %v722
    %1497 = vmatmul.mubr.f32.gmra.mrb[0].mxu0 %v554
    %v1498 = vpop.f32.mrb[0].mxu0
    %v1499 = vadd.f32 %v1290, %v1498
    %v1500 = vpop.f32.mrb[0].mxu0
    %v1501 = vadd.f32 %v1292, %v1500
    %1502 = vmatprep.mubr.f32.mxu0 %v725
    %1503 = vmatmul.mubr.f32.gmra.mrb[0].mxu0 %v562
    %v1504 = vpop.f32.mrb[0].mxu0
    %v1505 = vadd.f32 %v1296, %v1504
    %v1506 = vpop.f32.mrb[0].mxu0
    %v1507 = vadd.f32 %v1298, %v1506
    %1508 = vmatprep.mubr.f32.mxu0 %v728
    %1509 = vmatmul.mubr.f32.gmra.mrb[0].mxu0 %v570
    %v1510 = vpop.f32.mrb[0].mxu0
    %v1511 = vadd.f32 %v1302, %v1510
    %v1512 = vpop.f32.mrb[0].mxu0
    %v1513 = vadd.f32 %v1304, %v1512
    %1514 = vmatprep.mubr.f32.mxu0 %v731
    %1515 = vmatmul.mubr.f32.gmra.mrb[0].mxu0 %v578
    %v1516 = vpop.f32.mrb[0].mxu0
    %v1517 = vadd.f32 %v1308, %v1516
    %v1518 = vpop.f32.mrb[0].mxu0
    %v1519 = vadd.f32 %v1310, %v1518
    %1520 = vmatprep.mubr.f32.mxu0 %v734
    %1521 = vmatmul.mubr.f32.gmra.mrb[0].mxu0 %v586
    %v1522 = vpop.f32.mrb[0].mxu0
    %v1523 = vadd.f32 %v1314, %v1522
    %v1524 = vpop.f32.mrb[0].mxu0
    %v1525 = vadd.f32 %v1316, %v1524
    %1526 = vmatprep.mubr.f32.mxu0 %v737
    %1527 = vmatmul.mubr.f32.gmra.mrb[0].mxu0 %v594
    %v1528 = vpop.f32.mrb[0].mxu0
    %v1529 = vadd.f32 %v1320, %v1528
    %v1530 = vpop.f32.mrb[0].mxu0
    %v1531 = vadd.f32 %v1322, %v1530
    %1532 = vmatprep.mubr.f32.mxu0 %v740
    %1533 = vmatmul.mubr.f32.gmra.mrb[0].mxu0 %v602
    %v1534 = vpop.f32.mrb[0].mxu0
    %v1535 = vadd.f32 %v1326, %v1534
    %v1536 = vpop.f32.mrb[0].mxu0
    %v1537 = vadd.f32 %v1328, %v1536
    %1538 = vmatprep.mubr.f32.mxu0 %v743
    %1539 = vmatmul.mubr.f32.gmra.mrb[0].mxu0 %v610
    %v1540 = vpop.f32.mrb[0].mxu0
    %v1541 = vadd.f32 %v1332, %v1540
    %v1542 = vpop.f32.mrb[0].mxu0
    %v1543 = vadd.f32 %v1334, %v1542
    %1544 = vmatprep.mubr.f32.mxu0 %v746
    %1545 = vmatmul.mubr.f32.gmra.mrb[0].mxu0 %v618
    %v1546 = vpop.f32.mrb[0].mxu0
    %v1547 = vadd.f32 %v1338, %v1546
    %v1548 = vpop.f32.mrb[0].mxu0
    %v1549 = vadd.f32 %v1340, %v1548
    %1550 = vmatprep.mubr.f32.mxu0 %v749
    %1551 = vmatmul.mubr.f32.gmra.mrb[0].mxu0 %v626
    %v1552 = vpop.f32.mrb[0].mxu0
    %v1553 = vadd.f32 %v1344, %v1552
    %v1554 = vpop.f32.mrb[0].mxu0
    %v1555 = vadd.f32 %v1346, %v1554
    %1556 = vmatprep.mubr.f32.mxu0 %v752
    %1557 = vmatmul.mubr.f32.gmra.mrb[0].mxu0 %v634
    %v1558 = vpop.f32.mrb[0].mxu0
    %v1559 = vadd.f32 %v1350, %v1558
    %v1560 = vpop.f32.mrb[0].mxu0
    %v1561 = vadd.f32 %v1352, %v1560
    %1562 = vmatprep.mubr.f32.mxu0 %v755
    %1563 = vmatmul.mubr.f32.gmra.mrb[0].mxu0 %v642
    %v1564 = vpop.f32.mrb[0].mxu0
    %v1565 = vadd.f32 %v1356, %v1564
    %v1566 = vpop.f32.mrb[0].mxu0
    %v1567 = vadd.f32 %v1358, %v1566
    %1568 = vmatprep.mubr.f32.mxu0 %v758
    %1569 = vmatmul.mubr.f32.gmra.mrb[0].mxu0 %v650
    %v1570 = vpop.f32.mrb[0].mxu0
    %v1571 = vadd.f32 %v1362, %v1570
    %v1572 = vpop.f32.mrb[0].mxu0
    %v1573 = vadd.f32 %v1364, %v1572
    %1574 = vmatprep.mubr.f32.mxu0 %v761
    %1575 = vmatmul.mubr.f32.gmra.mrb[0].mxu0 %v658
    %v1576 = vpop.f32.mrb[0].mxu0
    %v1577 = vadd.f32 %v1368, %v1576
    %v1578 = vpop.f32.mrb[0].mxu0
    %v1579 = vadd.f32 %v1370, %v1578
    %1580 = vmatprep.mubr.f32.mxu0 %v764
    %1581 = vmatmul.mubr.f32.gmra.mrb[0].mxu0 %v666
    %v1582 = vpop.f32.mrb[0].mxu0
    %v1583 = vadd.f32 %v1374, %v1582
    %v1584 = vpop.f32.mrb[0].mxu0
    %v1585 = vadd.f32 %v1376, %v1584
    %1586 = vmatprep.mubr.f32.mxu0 %v767
    %1587 = vmatmul.mubr.f32.gmra.mrb[0].mxu0 %v674
    %v1588 = vpop.f32.mrb[0].mxu0
    %v1589 = vadd.f32 %v1380, %v1588
    %v1590 = vpop.f32.mrb[0].mxu0
    %v1591 = vadd.f32 %v1382, %v1590
    %1592 = vmatprep.mubr.f32.mxu0 %v770
    %1593 = vmatmul.mubr.f32.gmra.mrb[0].mxu0 %v682
    %v1594 = vpop.f32.mrb[0].mxu0
    %v1595 = vadd.f32 %v1386, %v1594
    %v1596 = vpop.f32.mrb[0].mxu0
    %v1597 = vadd.f32 %v1388, %v1596
    %1598 = vmatprep.mubr.f32.mxu0 %v773
    %1599 = vmatmul.mubr.f32.gmra.mrb[0].mxu0 %v690
    %v1600 = vpop.f32.mrb[0].mxu0
    %v1601 = vadd.f32 %v1392, %v1600
    %v1602 = vpop.f32.mrb[0].mxu0
    %v1603 = vadd.f32 %v1394, %v1602
    %1604 = vmatprep.mubr.f32.mxu0 %v776
    %1605 = vmatmul.mubr.f32.gmra.mrb[0].mxu0 %v698
    %v1606 = vpop.f32.mrb[0].mxu0
    %v1607 = vadd.f32 %v1398, %v1606
    %v1608 = vpop.f32.mrb[0].mxu0
    %v1609 = vadd.f32 %v1400, %v1608
    %1610 = vmatprep.mubr.f32.mxu0 %v779
    %1611 = vmatmul.mubr.f32.gmra.mrb[0].mxu0 %v706
    %v1612 = vpop.f32.mrb[0].mxu0
    %v1613 = vadd.f32 %v1404, %v1612
    %v1614 = vpop.f32.mrb[0].mxu0
    %v1615 = vadd.f32 %v1406, %v1614
    %1616 = vdwg.mxu0
    %1617 = vst [vmem:[#allocation2] sm:$0xff] %v1475
    %vm1618 = vcmask 556032
    %1619 = vst.msk [vmem:[#allocation2 + $0x8] sm:$0xff] %vm1618, %v1477
    %1620 = vst [vmem:[#allocation2 + $0x10] sm:$0xff] %v1481
    %1621 = vst.msk [vmem:[#allocation2 + $0x18] sm:$0xff] %vm1618, %v1483
    %1622 = vst [vmem:[#allocation2 + $0x20] sm:$0xff] %v1487
    %1623 = vst.msk [vmem:[#allocation2 + $0x28] sm:$0xff] %vm1618, %v1489
    %1624 = vst [vmem:[#allocation2 + $0x30] sm:$0xff] %v1493
    %1625 = vst.msk [vmem:[#allocation2 + $0x38] sm:$0xff] %vm1618, %v1495
    %1626 = vst [vmem:[#allocation2 + $0x40] sm:$0xff] %v1499
    %1627 = vst.msk [vmem:[#allocation2 + $0x48] sm:$0xff] %vm1618, %v1501
    %1628 = vst [vmem:[#allocation2 + $0x50] sm:$0xff] %v1505
    %1629 = vst.msk [vmem:[#allocation2 + $0x58] sm:$0xff] %vm1618, %v1507
    %1630 = vst [vmem:[#allocation2 + $0x60] sm:$0xff] %v1511
    %1631 = vst.msk [vmem:[#allocation2 + $0x68] sm:$0xff] %vm1618, %v1513
    %1632 = vst [vmem:[#allocation2 + $0x70] sm:$0xff] %v1517
    %1633 = vst.msk [vmem:[#allocation2 + $0x78] sm:$0xff] %vm1618, %v1519
    %1634 = vst [vmem:[#allocation2 + $0x80] sm:$0xff] %v1523
    %1635 = vst.msk [vmem:[#allocation2 + $0x88] sm:$0xff] %vm1618, %v1525
    %1636 = vst [vmem:[#allocation2 + $0x90] sm:$0xff] %v1529
    %1637 = vst.msk [vmem:[#allocation2 + $0x98] sm:$0xff] %vm1618, %v1531
    %1638 = vst [vmem:[#allocation2 + $0xa0] sm:$0xff] %v1535
    %1639 = vst.msk [vmem:[#allocation2 + $0xa8] sm:$0xff] %vm1618, %v1537
    %1640 = vst [vmem:[#allocation2 + $0xb0] sm:$0xff] %v1541
    %1641 = vst.msk [vmem:[#allocation2 + $0xb8] sm:$0xff] %vm1618, %v1543
    %1642 = vst [vmem:[#allocation2 + $0xc0] sm:$0xff] %v1547
    %1643 = vst.msk [vmem:[#allocation2 + $0xc8] sm:$0xff] %vm1618, %v1549
    %1644 = vst [vmem:[#allocation2 + $0xd0] sm:$0xff] %v1553
    %1645 = vst.msk [vmem:[#allocation2 + $0xd8] sm:$0xff] %vm1618, %v1555
    %1646 = vst [vmem:[#allocation2 + $0xe0] sm:$0xff] %v1559
    %1647 = vst.msk [vmem:[#allocation2 + $0xe8] sm:$0xff] %vm1618, %v1561
    %1648 = vst [vmem:[#allocation2 + $0xf0] sm:$0xff] %v1565
    %1649 = vst.msk [vmem:[#allocation2 + $0xf8] sm:$0xff] %vm1618, %v1567
    %1650 = vst [vmem:[#allocation2 + $0x100] sm:$0xff] %v1571
    %1651 = vst.msk [vmem:[#allocation2 + $0x108] sm:$0xff] %vm1618, %v1573
    %1652 = vst [vmem:[#allocation2 + $0x110] sm:$0xff] %v1577
    %1653 = vst.msk [vmem:[#allocation2 + $0x118] sm:$0xff] %vm1618, %v1579
    %1654 = vst [vmem:[#allocation2 + $0x120] sm:$0xff] %v1583
    %1655 = vst.msk [vmem:[#allocation2 + $0x128] sm:$0xff] %vm1618, %v1585
    %1656 = vst [vmem:[#allocation2 + $0x130] sm:$0xff] %v1589
    %1657 = vst.msk [vmem:[#allocation2 + $0x138] sm:$0xff] %vm1618, %v1591
    %1658 = vst [vmem:[#allocation2 + $0x140] sm:$0xff] %v1595
    %1659 = vst.msk [vmem:[#allocation2 + $0x148] sm:$0xff] %vm1618, %v1597
    %1660 = vst [vmem:[#allocation2 + $0x150] sm:$0xff] %v1601
    %1661 = vst.msk [vmem:[#allocation2 + $0x158] sm:$0xff] %vm1618, %v1603
    %1662 = vst [vmem:[#allocation2 + $0x160] sm:$0xff] %v1607
    %1663 = vst.msk [vmem:[#allocation2 + $0x168] sm:$0xff] %vm1618, %v1609
    %1664 = vst [vmem:[#allocation2 + $0x170] sm:$0xff] %v1613
    %1665 = vst.msk [vmem:[#allocation2 + $0x178] sm:$0xff] %vm1618, %v1615
    // Predicated region
    $region10: #{tpu_custom_call.1} parent=1 // pred_check
      _
    $region11: #{tpu_custom_call.1} parent=1 // pred_check_branch
      %1667 = sbr.rel (0) target = $region13
    $region12: #{tpu_custom_call.1} parent=1 // pred_region
      %s1669 = ssub.s32 6144, 6144
      %1670 = vsyncadd [#allocation3], %s1669
      %s1671 = sshll.u32 [#allocation2], 4
      %s1672 = int_to_ptr.vmem [resolvable:$true] %s1671
      %1677 = dma.vmem_to_hbm [thread:$0]  %s1672, 6144, %s2, [#allocation3], 256, 256, 16
    $region13: #{tpu_custom_call.1} parent=1 // pred_fallthru
      _
    // Predicated region
    $region14: #{tpu_custom_call.1} parent=1 // pred_check
      _
    $region15: #{tpu_custom_call.1} parent=1 // pred_check_branch
      %1679 = sbr.rel (0) target = $region17
    $region16: #{tpu_custom_call.1} parent=1 // pred_region
      %1680 = dma.done [#allocation3], 6144
    $region17: #{tpu_custom_call.1} parent=1 // pred_fallthru
      _
    %1681 = vsyncpa [#allocation3], 1

</llo_original>
